<compile_context>
chip_gen: v6e
topology: v6e:2x2x1
jax: 0.10.0
libtpu: 0.0.40
codegen_flags: <defaults>
</compile_context>

<pallas_src>
import functools

import jax
import jax.numpy as jnp
from jax import lax
from jax.experimental import pallas as pl
from jax.experimental.pallas import tpu as pltpu


def _round_up(x: int, m: int) -> int:
    return ((x + m - 1) // m) * m


def _vicreg_kernel(za_ref, zb_ref, out_ref,
                   sum_a, sum_b, sumsq_a, sumsq_b, diffsq, gram_a, gram_b,
                   *, n, d, lambda_param, mu_param, nu_param, eps):
    step = pl.program_id(0)
    last = pl.num_programs(0) - 1

    @pl.when(step == 0)
    def _init():
        sum_a[...] = jnp.zeros_like(sum_a)
        sum_b[...] = jnp.zeros_like(sum_b)
        sumsq_a[...] = jnp.zeros_like(sumsq_a)
        sumsq_b[...] = jnp.zeros_like(sumsq_b)
        diffsq[...] = jnp.zeros_like(diffsq)
        gram_a[...] = jnp.zeros_like(gram_a)
        gram_b[...] = jnp.zeros_like(gram_b)

    za_raw = za_ref[...]                       # native dtype feeds the MXU
    zb_raw = zb_ref[...]
    za = za_raw.astype(jnp.float32)            # f32 for elementwise statistics
    zb = zb_raw.astype(jnp.float32)

    # Column-wise sufficient statistics (zero-padded rows contribute nothing).
    sum_a[...] += jnp.sum(za, axis=0, keepdims=True)
    sum_b[...] += jnp.sum(zb, axis=0, keepdims=True)
    sumsq_a[...] += jnp.sum(za * za, axis=0, keepdims=True)
    sumsq_b[...] += jnp.sum(zb * zb, axis=0, keepdims=True)
    diff = za - zb
    diffsq[...] += jnp.sum(diff * diff, axis=0, keepdims=True)

    # Gram accumulation: contract the row axis directly (no transpose), f32 acc.
    dn_rows = (((0,), (0,)), ((), ()))
    gram_a[...] += lax.dot_general(za_raw, za_raw, dimension_numbers=dn_rows,
                                   preferred_element_type=jnp.float32)
    gram_b[...] += lax.dot_general(zb_raw, zb_raw, dimension_numbers=dn_rows,
                                   preferred_element_type=jnp.float32)

    @pl.when(step == last)
    def _finalize():
        n_f = float(n)
        d_f = float(d)
        d_pad = sum_a.shape[-1]
        col_mask = None
        if d_pad != d:  # static (trace-time) branch: mask padded feature lanes
            col_mask = lax.broadcasted_iota(jnp.int32, (1, d_pad), 1) < d

        dn_matvec = (((1,), (0,)), ((), ()))

        def per_input(col_sum_ref, col_sumsq_ref, gram_ref):
            s = col_sum_ref[...]                           # (1, Dp)
            mean = s / n_f
            # Unbiased per-column variance == diagonal of the covariance matrix.
            var = (col_sumsq_ref[...] - mean * s) / (n_f - 1.0)
            std = jnp.sqrt(jnp.maximum(var, 0.0) + eps)
            hinge = jnp.maximum(1.0 - std, 0.0)
            if col_mask is not None:
                hinge = jnp.where(col_mask, hinge, 0.0)
            v_loss = jnp.sum(hinge) / d_f

            # sum(cov^2) = [sum(G^2) - 2 n m^T G m + n^2 (sum m^2)^2] / (n-1)^2
            g = gram_ref[...]
            gg = jnp.sum(g * g)
            mg = lax.dot_general(mean, g, dimension_numbers=dn_matvec,
                                 preferred_element_type=jnp.float32)   # (1, Dp)
            mgm = jnp.sum(mg * mean)
            m2 = jnp.sum(mean * mean)
            frob = (gg - 2.0 * n_f * mgm + (n_f * m2) ** 2) / ((n_f - 1.0) ** 2)
            c_loss = (frob - jnp.sum(var * var)) / d_f     # Frobenius - diagonal
            return v_loss, c_loss

        va, ca = per_input(sum_a, sumsq_a, gram_a)
        vb, cb = per_input(sum_b, sumsq_b, gram_b)

        invariance = jnp.sum(diffsq[...]) / (n_f * d_f)
        loss = (lambda_param * invariance
                + mu_param * (va + vb)
                + nu_param * (ca + cb))
        out_ref[0, 0] = loss


def vicreg_loss(z_a, z_b, *, lambda_param=25.0, mu_param=25.0, nu_param=1.0,
                eps=1e-4, row_tile=None):
    """VICRegLoss.forward (gather_distributed=False path)."""
    # TODO(synk): gather_distributed (torch.distributed all_gather) path not
    # implemented; single-device semantics only.
    n, d = z_a.shape
    assert z_b.shape == (n, d), "z_a and z_b must have the same shape"
    assert n >= 2, "VICReg needs at least 2 samples (divides by n - 1)"

    # Lane-pad the feature dim to a multiple of 128; zero-pad rows to the tile.
    d_pad = _round_up(d, 128)
    if row_tile is None:
        tile_n = _round_up(n, 8) if n <= 1024 else 512
    else:
        tile_n = _round_up(int(row_tile), 8)
    tile_n = min(tile_n, _round_up(n, 8))
    n_pad = _round_up(n, tile_n)

    if (n_pad, d_pad) != (n, d):
        z_a = jnp.pad(z_a, ((0, n_pad - n), (0, d_pad - d)))
        z_b = jnp.pad(z_b, ((0, n_pad - n), (0, d_pad - d)))

    grid = (n_pad // tile_n,)

    kernel = functools.partial(
        _vicreg_kernel,
        n=n, d=d,
        lambda_param=float(lambda_param),
        mu_param=float(mu_param),
        nu_param=float(nu_param),
        eps=float(eps),
    )

    # Raise the scoped-VMEM limit only when the working set demands it.
    itemsize = jnp.dtype(z_a.dtype).itemsize
    est_bytes = (2 * 2 * tile_n * d_pad * itemsize        # double-buffered inputs
                 + (5 * d_pad + 2 * d_pad * d_pad) * 4)   # f32 scratch accumulators
    vmem_limit = int(est_bytes + (8 << 20)) if est_bytes > (24 << 20) else None

    out = pl.pallas_call(
        kernel,
        out_shape=jax.ShapeDtypeStruct((1, 1), jnp.float32),
        grid=grid,
        in_specs=[
            pl.BlockSpec((tile_n, d_pad), lambda i: (i, 0)),
            pl.BlockSpec((tile_n, d_pad), lambda i: (i, 0)),
        ],
        out_specs=pl.BlockSpec(memory_space=pltpu.SMEM),
        scratch_shapes=[
            pltpu.VMEM((1, d_pad), jnp.float32),       # sum_a
            pltpu.VMEM((1, d_pad), jnp.float32),       # sum_b
            pltpu.VMEM((1, d_pad), jnp.float32),       # sumsq_a
            pltpu.VMEM((1, d_pad), jnp.float32),       # sumsq_b
            pltpu.VMEM((1, d_pad), jnp.float32),       # diffsq
            pltpu.VMEM((d_pad, d_pad), jnp.float32),   # gram_a
            pltpu.VMEM((d_pad, d_pad), jnp.float32),   # gram_b
        ],
        compiler_params=pltpu.CompilerParams(
            dimension_semantics=("arbitrary",),
            vmem_limit_bytes=vmem_limit,
        ),
    )(z_a, z_b)
    return out[0, 0]


def _vicreg_loss_ref(z_a, z_b, lambda_param=25.0, mu_param=25.0, nu_param=1.0,
                     eps=1e-4):
    """Pure-JAX reference mirroring the PyTorch module."""
    z_a = z_a.astype(jnp.float32)
    z_b = z_b.astype(jnp.float32)
    n, d = z_a.shape

    invariance = jnp.mean((z_a - z_b) ** 2)

    def var_loss(x):
        std = jnp.sqrt(jnp.var(x, axis=0, ddof=1) + eps)
        return jnp.mean(jax.nn.relu(1.0 - std))

    def cov_loss(x):
        xc = x - x.mean(axis=0)
        cov = (xc.T @ xc) / (n - 1)
        off = cov - jnp.diag(jnp.diagonal(cov))
        return jnp.sum(off ** 2) / d

    variance = var_loss(z_a) + var_loss(z_b)
    covariance = cov_loss(z_a) + cov_loss(z_b)
    return lambda_param * invariance + mu_param * variance + nu_param * covariance


if __name__ == "__main__":
    key = jax.random.PRNGKey(0)
    ka, kb, kc, kd = jax.random.split(key, 4)

    # Primary small case.
    N, D = 8, 32
    z_a = jax.random.normal(ka, (N, D), dtype=jnp.float32)
    z_b = jax.random.normal(kb, (N, D), dtype=jnp.float32)
    loss = jax.block_until_ready(vicreg_loss(z_a, z_b))
    ref = _vicreg_loss_ref(z_a, z_b)
    assert jnp.allclose(loss, ref, rtol=1e-4, atol=1e-4), (loss, ref)

    # Multi-tile streaming case: exercises row zero-padding, lane padding mask
    # and the cross-grid-step accumulators.
    N2, D2 = 30, 160
    z_a2 = jax.random.normal(kc, (N2, D2), dtype=jnp.float32)
    z_b2 = jax.random.normal(kd, (N2, D2), dtype=jnp.float32)
    loss2 = jax.block_until_ready(vicreg_loss(z_a2, z_b2, row_tile=8))
    ref2 = _vicreg_loss_ref(z_a2, z_b2)
    assert jnp.allclose(loss2, ref2, rtol=1e-4, atol=1e-4), (loss2, ref2)

    print("KERNEL_OK")
</pallas_src>

<mosaic_0001>
module attributes {stable_mosaic.version = 11 : i64} {
  func.func @_vicreg_kernel(%arg0: i32, %arg1: memref<8x128xf32, #tpu.memory_space<vmem>>, %arg2: memref<8x128xf32, #tpu.memory_space<vmem>>, %arg3: memref<1x1xf32, #tpu.memory_space<smem>>, %arg4: memref<1x128xf32, #tpu.memory_space<vmem>>, %arg5: memref<1x128xf32, #tpu.memory_space<vmem>>, %arg6: memref<1x128xf32, #tpu.memory_space<vmem>>, %arg7: memref<1x128xf32, #tpu.memory_space<vmem>>, %arg8: memref<1x128xf32, #tpu.memory_space<vmem>>, %arg9: memref<128x128xf32, #tpu.memory_space<vmem>>, %arg10: memref<128x128xf32, #tpu.memory_space<vmem>>) attributes {dimension_semantics = [#tpu.dimension_semantics<arbitrary>], iteration_bounds = array<i64: 1>, scalar_prefetch = 0 : i64, scratch_operands = 7 : i64, tpu.core_type = #tpu.core_type<tc>, window_params = [{transform_indices = @transform_0, window_bounds = array<i64: 8, 128>}, {transform_indices = @transform_1, window_bounds = array<i64: 8, 128>}, {transform_indices = @transform_2, window_bounds = array<i64: 1, 1>}]} {
    %c0_i32 = arith.constant 0 : i32
    %0 = arith.cmpi eq, %arg0, %c0_i32 : i32
    %1 = arith.extui %0 : i1 to i32
    %c0_i32_0 = arith.constant 0 : i32
    %2 = arith.cmpi ne, %1, %c0_i32_0 : i32
    scf.if %2 {
      %cst_40 = arith.constant 0.000000e+00 : f32
      %45 = vector.broadcast %cst_40 : f32 to vector<1x128xf32>
      %c0_41 = arith.constant 0 : index
      %c0_42 = arith.constant 0 : index
      %46 = vector.load %arg4[%c0_41, %c0_42] : memref<1x128xf32, #tpu.memory_space<vmem>>, vector<1x128xf32>
      tpu.vector_store %arg4[%c0_41, %c0_42], %45 {strides = array<i32>} : memref<1x128xf32, #tpu.memory_space<vmem>>, vector<1x128xf32>,
      %cst_43 = arith.constant 0.000000e+00 : f32
      %47 = vector.broadcast %cst_43 : f32 to vector<1x128xf32>
      %c0_44 = arith.constant 0 : index
      %c0_45 = arith.constant 0 : index
      %48 = vector.load %arg5[%c0_44, %c0_45] : memref<1x128xf32, #tpu.memory_space<vmem>>, vector<1x128xf32>
      tpu.vector_store %arg5[%c0_44, %c0_45], %47 {strides = array<i32>} : memref<1x128xf32, #tpu.memory_space<vmem>>, vector<1x128xf32>,
      %cst_46 = arith.constant 0.000000e+00 : f32
      %49 = vector.broadcast %cst_46 : f32 to vector<1x128xf32>
      %c0_47 = arith.constant 0 : index
      %c0_48 = arith.constant 0 : index
      %50 = vector.load %arg6[%c0_47, %c0_48] : memref<1x128xf32, #tpu.memory_space<vmem>>, vector<1x128xf32>
      tpu.vector_store %arg6[%c0_47, %c0_48], %49 {strides = array<i32>} : memref<1x128xf32, #tpu.memory_space<vmem>>, vector<1x128xf32>,
      %cst_49 = arith.constant 0.000000e+00 : f32
      %51 = vector.broadcast %cst_49 : f32 to vector<1x128xf32>
      %c0_50 = arith.constant 0 : index
      %c0_51 = arith.constant 0 : index
      %52 = vector.load %arg7[%c0_50, %c0_51] : memref<1x128xf32, #tpu.memory_space<vmem>>, vector<1x128xf32>
      tpu.vector_store %arg7[%c0_50, %c0_51], %51 {strides = array<i32>} : memref<1x128xf32, #tpu.memory_space<vmem>>, vector<1x128xf32>,
      %cst_52 = arith.constant 0.000000e+00 : f32
      %53 = vector.broadcast %cst_52 : f32 to vector<1x128xf32>
      %c0_53 = arith.constant 0 : index
      %c0_54 = arith.constant 0 : index
      %54 = vector.load %arg8[%c0_53, %c0_54] : memref<1x128xf32, #tpu.memory_space<vmem>>, vector<1x128xf32>
      tpu.vector_store %arg8[%c0_53, %c0_54], %53 {strides = array<i32>} : memref<1x128xf32, #tpu.memory_space<vmem>>, vector<1x128xf32>,
      %cst_55 = arith.constant 0.000000e+00 : f32
      %55 = vector.broadcast %cst_55 : f32 to vector<128x128xf32>
      %c0_56 = arith.constant 0 : index
      %c0_57 = arith.constant 0 : index
      %56 = vector.load %arg9[%c0_56, %c0_57] : memref<128x128xf32, #tpu.memory_space<vmem>>, vector<128x128xf32>
      tpu.vector_store %arg9[%c0_56, %c0_57], %55 {strides = array<i32>} : memref<128x128xf32, #tpu.memory_space<vmem>>, vector<128x128xf32>,
      %cst_58 = arith.constant 0.000000e+00 : f32
      %57 = vector.broadcast %cst_58 : f32 to vector<128x128xf32>
      %c0_59 = arith.constant 0 : index
      %c0_60 = arith.constant 0 : index
      %58 = vector.load %arg10[%c0_59, %c0_60] : memref<128x128xf32, #tpu.memory_space<vmem>>, vector<128x128xf32>
      tpu.vector_store %arg10[%c0_59, %c0_60], %57 {strides = array<i32>} : memref<128x128xf32, #tpu.memory_space<vmem>>, vector<128x128xf32>,
    } else {
    }
    %c0 = arith.constant 0 : index
    %c0_1 = arith.constant 0 : index
    %3 = vector.load %arg1[%c0, %c0_1] : memref<8x128xf32, #tpu.memory_space<vmem>>, vector<8x128xf32>
    %c0_2 = arith.constant 0 : index
    %c0_3 = arith.constant 0 : index
    %4 = vector.load %arg2[%c0_2, %c0_3] : memref<8x128xf32, #tpu.memory_space<vmem>>, vector<8x128xf32>
    %c0_4 = arith.constant 0 : index
    %c0_5 = arith.constant 0 : index
    %5 = vector.load %arg4[%c0_4, %c0_5] : memref<1x128xf32, #tpu.memory_space<vmem>>, vector<1x128xf32>
    %cst = arith.constant dense<0.000000e+00> : vector<128xf32>
    %6 = vector.multi_reduction <add>, %3, %cst [0] : vector<8x128xf32> to vector<128xf32>
    %7 = vector.shape_cast %6 : vector<128xf32> to vector<1x128xf32>
    %8 = arith.addf %5, %7 : vector<1x128xf32>
    %c0_6 = arith.constant 0 : index
    %c0_7 = arith.constant 0 : index
    %9 = vector.load %arg4[%c0_6, %c0_7] : memref<1x128xf32, #tpu.memory_space<vmem>>, vector<1x128xf32>
    tpu.vector_store %arg4[%c0_6, %c0_7], %8 {strides = array<i32>} : memref<1x128xf32, #tpu.memory_space<vmem>>, vector<1x128xf32>,
    %c0_8 = arith.constant 0 : index
    %c0_9 = arith.constant 0 : index
    %10 = vector.load %arg5[%c0_8, %c0_9] : memref<1x128xf32, #tpu.memory_space<vmem>>, vector<1x128xf32>
    %cst_10 = arith.constant dense<0.000000e+00> : vector<128xf32>
    %11 = vector.multi_reduction <add>, %4, %cst_10 [0] : vector<8x128xf32> to vector<128xf32>
    %12 = vector.shape_cast %11 : vector<128xf32> to vector<1x128xf32>
    %13 = arith.addf %10, %12 : vector<1x128xf32>
    %c0_11 = arith.constant 0 : index
    %c0_12 = arith.constant 0 : index
    %14 = vector.load %arg5[%c0_11, %c0_12] : memref<1x128xf32, #tpu.memory_space<vmem>>, vector<1x128xf32>
    tpu.vector_store %arg5[%c0_11, %c0_12], %13 {strides = array<i32>} : memref<1x128xf32, #tpu.memory_space<vmem>>, vector<1x128xf32>,
    %c0_13 = arith.constant 0 : index
    %c0_14 = arith.constant 0 : index
    %15 = vector.load %arg6[%c0_13, %c0_14] : memref<1x128xf32, #tpu.memory_space<vmem>>, vector<1x128xf32>
    %16 = arith.mulf %3, %3 : vector<8x128xf32>
    %cst_15 = arith.constant dense<0.000000e+00> : vector<128xf32>
    %17 = vector.multi_reduction <add>, %16, %cst_15 [0] : vector<8x128xf32> to vector<128xf32>
    %18 = vector.shape_cast %17 : vector<128xf32> to vector<1x128xf32>
    %19 = arith.addf %15, %18 : vector<1x128xf32>
    %c0_16 = arith.constant 0 : index
    %c0_17 = arith.constant 0 : index
    %20 = vector.load %arg6[%c0_16, %c0_17] : memref<1x128xf32, #tpu.memory_space<vmem>>, vector<1x128xf32>
    tpu.vector_store %arg6[%c0_16, %c0_17], %19 {strides = array<i32>} : memref<1x128xf32, #tpu.memory_space<vmem>>, vector<1x128xf32>,
    %c0_18 = arith.constant 0 : index
    %c0_19 = arith.constant 0 : index
    %21 = vector.load %arg7[%c0_18, %c0_19] : memref<1x128xf32, #tpu.memory_space<vmem>>, vector<1x128xf32>
    %22 = arith.mulf %4, %4 : vector<8x128xf32>
    %cst_20 = arith.constant dense<0.000000e+00> : vector<128xf32>
    %23 = vector.multi_reduction <add>, %22, %cst_20 [0] : vector<8x128xf32> to vector<128xf32>
    %24 = vector.shape_cast %23 : vector<128xf32> to vector<1x128xf32>
    %25 = arith.addf %21, %24 : vector<1x128xf32>
    %c0_21 = arith.constant 0 : index
    %c0_22 = arith.constant 0 : index
    %26 = vector.load %arg7[%c0_21, %c0_22] : memref<1x128xf32, #tpu.memory_space<vmem>>, vector<1x128xf32>
    tpu.vector_store %arg7[%c0_21, %c0_22], %25 {strides = array<i32>} : memref<1x128xf32, #tpu.memory_space<vmem>>, vector<1x128xf32>,
    %27 = arith.subf %3, %4 : vector<8x128xf32>
    %c0_23 = arith.constant 0 : index
    %c0_24 = arith.constant 0 : index
    %28 = vector.load %arg8[%c0_23, %c0_24] : memref<1x128xf32, #tpu.memory_space<vmem>>, vector<1x128xf32>
    %29 = arith.mulf %27, %27 : vector<8x128xf32>
    %cst_25 = arith.constant dense<0.000000e+00> : vector<128xf32>
    %30 = vector.multi_reduction <add>, %29, %cst_25 [0] : vector<8x128xf32> to vector<128xf32>
    %31 = vector.shape_cast %30 : vector<128xf32> to vector<1x128xf32>
    %32 = arith.addf %28, %31 : vector<1x128xf32>
    %c0_26 = arith.constant 0 : index
    %c0_27 = arith.constant 0 : index
    %33 = vector.load %arg8[%c0_26, %c0_27] : memref<1x128xf32, #tpu.memory_space<vmem>>, vector<1x128xf32>
    tpu.vector_store %arg8[%c0_26, %c0_27], %32 {strides = array<i32>} : memref<1x128xf32, #tpu.memory_space<vmem>>, vector<1x128xf32>,
    %c0_28 = arith.constant 0 : index
    %c0_29 = arith.constant 0 : index
    %34 = vector.load %arg9[%c0_28, %c0_29] : memref<128x128xf32, #tpu.memory_space<vmem>>, vector<128x128xf32>
    %cst_30 = arith.constant dense<0.000000e+00> : vector<128x128xf32>
    %35 = tpu.matmul %3, %3, %cst_30 {dimension_numbers = #tpu.dot_dimension_numbers<[0], [0], [1], [1], [0, 1, 1, 1], [], []>} : vector<8x128xf32>, vector<8x128xf32>, vector<128x128xf32> -> vector<128x128xf32>
    %36 = arith.addf %34, %35 : vector<128x128xf32>
    %c0_31 = arith.constant 0 : index
    %c0_32 = arith.constant 0 : index
    %37 = vector.load %arg9[%c0_31, %c0_32] : memref<128x128xf32, #tpu.memory_space<vmem>>, vector<128x128xf32>
    tpu.vector_store %arg9[%c0_31, %c0_32], %36 {strides = array<i32>} : memref<128x128xf32, #tpu.memory_space<vmem>>, vector<128x128xf32>,
    %c0_33 = arith.constant 0 : index
    %c0_34 = arith.constant 0 : index
    %38 = vector.load %arg10[%c0_33, %c0_34] : memref<128x128xf32, #tpu.memory_space<vmem>>, vector<128x128xf32>
    %cst_35 = arith.constant dense<0.000000e+00> : vector<128x128xf32>
    %39 = tpu.matmul %4, %4, %cst_35 {dimension_numbers = #tpu.dot_dimension_numbers<[0], [0], [1], [1], [0, 1, 1, 1], [], []>} : vector<8x128xf32>, vector<8x128xf32>, vector<128x128xf32> -> vector<128x128xf32>
    %40 = arith.addf %38, %39 : vector<128x128xf32>
    %c0_36 = arith.constant 0 : index
    %c0_37 = arith.constant 0 : index
    %41 = vector.load %arg10[%c0_36, %c0_37] : memref<128x128xf32, #tpu.memory_space<vmem>>, vector<128x128xf32>
    tpu.vector_store %arg10[%c0_36, %c0_37], %40 {strides = array<i32>} : memref<128x128xf32, #tpu.memory_space<vmem>>, vector<128x128xf32>,
    %c0_i32_38 = arith.constant 0 : i32
    %42 = arith.cmpi eq, %arg0, %c0_i32_38 : i32
    %43 = arith.extui %42 : i1 to i32
    %c0_i32_39 = arith.constant 0 : i32
    %44 = arith.cmpi ne, %43, %c0_i32_39 : i32
    scf.if %44 {
      %45 = tpu.iota {dimensions = array<i32: 1>} : vector<1x128xi32>
      %c32_i32 = arith.constant 32 : i32
      %46 = vector.broadcast %c32_i32 : i32 to vector<1x128xi32>
      %47 = arith.cmpi slt, %45, %46 : vector<1x128xi32>
      %c0_40 = arith.constant 0 : index
      %c0_41 = arith.constant 0 : index
      %48 = vector.load %arg4[%c0_40, %c0_41] : memref<1x128xf32, #tpu.memory_space<vmem>>, vector<1x128xf32>
      %cst_42 = arith.constant 8.000000e+00 : f32
      %49 = vector.broadcast %cst_42 : f32 to vector<1x128xf32>
      %50 = arith.divf %48, %49 : vector<1x128xf32>
      %c0_43 = arith.constant 0 : index
      %c0_44 = arith.constant 0 : index
      %51 = vector.load %arg6[%c0_43, %c0_44] : memref<1x128xf32, #tpu.memory_space<vmem>>, vector<1x128xf32>
      %52 = arith.mulf %50, %48 : vector<1x128xf32>
      %53 = arith.subf %51, %52 : vector<1x128xf32>
      %cst_45 = arith.constant 7.000000e+00 : f32
      %54 = vector.broadcast %cst_45 : f32 to vector<1x128xf32>
      %55 = arith.divf %53, %54 : vector<1x128xf32>
      %cst_46 = arith.constant 0.000000e+00 : f32
      %56 = vector.broadcast %cst_46 : f32 to vector<1x128xf32>
      %57 = arith.maximumf %55, %56 : vector<1x128xf32>
      %cst_47 = arith.constant 9.99999974E-5 : f32
      %58 = vector.broadcast %cst_47 : f32 to vector<1x128xf32>
      %59 = arith.addf %57, %58 : vector<1x128xf32>
      %60 = math.sqrt %59 : vector<1x128xf32>
      %cst_48 = arith.constant 1.000000e+00 : f32
      %61 = vector.broadcast %cst_48 : f32 to vector<1x128xf32>
      %62 = arith.subf %61, %60 : vector<1x128xf32>
      %cst_49 = arith.constant 0.000000e+00 : f32
      %63 = vector.broadcast %cst_49 : f32 to vector<1x128xf32>
      %64 = arith.maximumf %62, %63 : vector<1x128xf32>
      %cst_50 = arith.constant 0.000000e+00 : f32
      %65 = vector.broadcast %cst_50 : f32 to vector<1x128xf32>
      %66 = arith.select %47, %64, %65 : vector<1x128xi1>, vector<1x128xf32>
      %67 = vector.shape_cast %66 : vector<1x128xf32> to vector<1x1x128xf32>
      %cst_51 = arith.constant dense<0.000000e+00> : vector<1xf32>
      %68 = vector.multi_reduction <add>, %67, %cst_51 [1, 2] : vector<1x1x128xf32> to vector<1xf32>
      %69 = vector.shape_cast %68 : vector<1xf32> to vector<1x1x1xf32>
      %70 = vector.extract %69[0, 0, 0] : f32 from vector<1x1x1xf32>
      %cst_52 = arith.constant 3.200000e+01 : f32
      %71 = arith.divf %70, %cst_52 : f32
      %c0_53 = arith.constant 0 : index
      %c0_54 = arith.constant 0 : index
      %72 = vector.load %arg9[%c0_53, %c0_54] : memref<128x128xf32, #tpu.memory_space<vmem>>, vector<128x128xf32>
      %73 = arith.mulf %72, %72 : vector<128x128xf32>
      %74 = vector.shape_cast %73 : vector<128x128xf32> to vector<1x128x128xf32>
      %cst_55 = arith.constant dense<0.000000e+00> : vector<1xf32>
      %75 = vector.multi_reduction <add>, %74, %cst_55 [1, 2] : vector<1x128x128xf32> to vector<1xf32>
      %76 = vector.shape_cast %75 : vector<1xf32> to vector<1x1x1xf32>
      %77 = vector.extract %76[0, 0, 0] : f32 from vector<1x1x1xf32>
      %cst_56 = arith.constant dense<0.000000e+00> : vector<1x128xf32>
      %78 = tpu.matmul %50, %72, %cst_56 {dimension_numbers = #tpu.dot_dimension_numbers<[1], [0], [0], [1], [0, 0, 1, 1], [], []>} : vector<1x128xf32>, vector<128x128xf32>, vector<1x128xf32> -> vector<1x128xf32>
      %79 = arith.mulf %78, %50 : vector<1x128xf32>
      %80 = vector.shape_cast %79 : vector<1x128xf32> to vector<1x1x128xf32>
      %cst_57 = arith.constant dense<0.000000e+00> : vector<1xf32>
      %81 = vector.multi_reduction <add>, %80, %cst_57 [1, 2] : vector<1x1x128xf32> to vector<1xf32>
      %82 = vector.shape_cast %81 : vector<1xf32> to vector<1x1x1xf32>
      %83 = vector.extract %82[0, 0, 0] : f32 from vector<1x1x1xf32>
      %84 = arith.mulf %50, %50 : vector<1x128xf32>
      %85 = vector.shape_cast %84 : vector<1x128xf32> to vector<1x1x128xf32>
      %cst_58 = arith.constant dense<0.000000e+00> : vector<1xf32>
      %86 = vector.multi_reduction <add>, %85, %cst_58 [1, 2] : vector<1x1x128xf32> to vector<1xf32>
      %87 = vector.shape_cast %86 : vector<1xf32> to vector<1x1x1xf32>
      %88 = vector.extract %87[0, 0, 0] : f32 from vector<1x1x1xf32>
      %cst_59 = arith.constant 1.600000e+01 : f32
      %89 = arith.mulf %cst_59, %83 : f32
      %90 = arith.subf %77, %89 : f32
      %cst_60 = arith.constant 8.000000e+00 : f32
      %91 = arith.mulf %cst_60, %88 : f32
      %92 = arith.mulf %91, %91 : f32
      %93 = arith.addf %90, %92 : f32
      %cst_61 = arith.constant 4.900000e+01 : f32
      %94 = arith.divf %93, %cst_61 : f32
      %95 = arith.mulf %55, %55 : vector<1x128xf32>
      %96 = vector.shape_cast %95 : vector<1x128xf32> to vector<1x1x128xf32>
      %cst_62 = arith.constant dense<0.000000e+00> : vector<1xf32>
      %97 = vector.multi_reduction <add>, %96, %cst_62 [1, 2] : vector<1x1x128xf32> to vector<1xf32>
      %98 = vector.shape_cast %97 : vector<1xf32> to vector<1x1x1xf32>
      %99 = vector.extract %98[0, 0, 0] : f32 from vector<1x1x1xf32>
      %100 = arith.subf %94, %99 : f32
      %cst_63 = arith.constant 3.200000e+01 : f32
      %101 = arith.divf %100, %cst_63 : f32
      %c0_64 = arith.constant 0 : index
      %c0_65 = arith.constant 0 : index
      %102 = vector.load %arg5[%c0_64, %c0_65] : memref<1x128xf32, #tpu.memory_space<vmem>>, vector<1x128xf32>
      %cst_66 = arith.constant 8.000000e+00 : f32
      %103 = vector.broadcast %cst_66 : f32 to vector<1x128xf32>
      %104 = arith.divf %102, %103 : vector<1x128xf32>
      %c0_67 = arith.constant 0 : index
      %c0_68 = arith.constant 0 : index
      %105 = vector.load %arg7[%c0_67, %c0_68] : memref<1x128xf32, #tpu.memory_space<vmem>>, vector<1x128xf32>
      %106 = arith.mulf %104, %102 : vector<1x128xf32>
      %107 = arith.subf %105, %106 : vector<1x128xf32>
      %cst_69 = arith.constant 7.000000e+00 : f32
      %108 = vector.broadcast %cst_69 : f32 to vector<1x128xf32>
      %109 = arith.divf %107, %108 : vector<1x128xf32>
      %cst_70 = arith.constant 0.000000e+00 : f32
      %110 = vector.broadcast %cst_70 : f32 to vector<1x128xf32>
      %111 = arith.maximumf %109, %110 : vector<1x128xf32>
      %cst_71 = arith.constant 9.99999974E-5 : f32
      %112 = vector.broadcast %cst_71 : f32 to vector<1x128xf32>
      %113 = arith.addf %111, %112 : vector<1x128xf32>
      %114 = math.sqrt %113 : vector<1x128xf32>
      %cst_72 = arith.constant 1.000000e+00 : f32
      %115 = vector.broadcast %cst_72 : f32 to vector<1x128xf32>
      %116 = arith.subf %115, %114 : vector<1x128xf32>
      %cst_73 = arith.constant 0.000000e+00 : f32
      %117 = vector.broadcast %cst_73 : f32 to vector<1x128xf32>
      %118 = arith.maximumf %116, %117 : vector<1x128xf32>
      %cst_74 = arith.constant 0.000000e+00 : f32
      %119 = vector.broadcast %cst_74 : f32 to vector<1x128xf32>
      %120 = arith.select %47, %118, %119 : vector<1x128xi1>, vector<1x128xf32>
      %121 = vector.shape_cast %120 : vector<1x128xf32> to vector<1x1x128xf32>
      %cst_75 = arith.constant dense<0.000000e+00> : vector<1xf32>
      %122 = vector.multi_reduction <add>, %121, %cst_75 [1, 2] : vector<1x1x128xf32> to vector<1xf32>
      %123 = vector.shape_cast %122 : vector<1xf32> to vector<1x1x1xf32>
      %124 = vector.extract %123[0, 0, 0] : f32 from vector<1x1x1xf32>
      %cst_76 = arith.constant 3.200000e+01 : f32
      %125 = arith.divf %124, %cst_76 : f32
      %c0_77 = arith.constant 0 : index
      %c0_78 = arith.constant 0 : index
      %126 = vector.load %arg10[%c0_77, %c0_78] : memref<128x128xf32, #tpu.memory_space<vmem>>, vector<128x128xf32>
      %127 = arith.mulf %126, %126 : vector<128x128xf32>
      %128 = vector.shape_cast %127 : vector<128x128xf32> to vector<1x128x128xf32>
      %cst_79 = arith.constant dense<0.000000e+00> : vector<1xf32>
      %129 = vector.multi_reduction <add>, %128, %cst_79 [1, 2] : vector<1x128x128xf32> to vector<1xf32>
      %130 = vector.shape_cast %129 : vector<1xf32> to vector<1x1x1xf32>
      %131 = vector.extract %130[0, 0, 0] : f32 from vector<1x1x1xf32>
      %cst_80 = arith.constant dense<0.000000e+00> : vector<1x128xf32>
      %132 = tpu.matmul %104, %126, %cst_80 {dimension_numbers = #tpu.dot_dimension_numbers<[1], [0], [0], [1], [0, 0, 1, 1], [], []>} : vector<1x128xf32>, vector<128x128xf32>, vector<1x128xf32> -> vector<1x128xf32>
      %133 = arith.mulf %132, %104 : vector<1x128xf32>
      %134 = vector.shape_cast %133 : vector<1x128xf32> to vector<1x1x128xf32>
      %cst_81 = arith.constant dense<0.000000e+00> : vector<1xf32>
      %135 = vector.multi_reduction <add>, %134, %cst_81 [1, 2] : vector<1x1x128xf32> to vector<1xf32>
      %136 = vector.shape_cast %135 : vector<1xf32> to vector<1x1x1xf32>
      %137 = vector.extract %136[0, 0, 0] : f32 from vector<1x1x1xf32>
      %138 = arith.mulf %104, %104 : vector<1x128xf32>
      %139 = vector.shape_cast %138 : vector<1x128xf32> to vector<1x1x128xf32>
      %cst_82 = arith.constant dense<0.000000e+00> : vector<1xf32>
      %140 = vector.multi_reduction <add>, %139, %cst_82 [1, 2] : vector<1x1x128xf32> to vector<1xf32>
      %141 = vector.shape_cast %140 : vector<1xf32> to vector<1x1x1xf32>
      %142 = vector.extract %141[0, 0, 0] : f32 from vector<1x1x1xf32>
      %cst_83 = arith.constant 1.600000e+01 : f32
      %143 = arith.mulf %cst_83, %137 : f32
      %144 = arith.subf %131, %143 : f32
      %cst_84 = arith.constant 8.000000e+00 : f32
      %145 = arith.mulf %cst_84, %142 : f32
      %146 = arith.mulf %145, %145 : f32
      %147 = arith.addf %144, %146 : f32
      %cst_85 = arith.constant 4.900000e+01 : f32
      %148 = arith.divf %147, %cst_85 : f32
      %149 = arith.mulf %109, %109 : vector<1x128xf32>
      %150 = vector.shape_cast %149 : vector<1x128xf32> to vector<1x1x128xf32>
      %cst_86 = arith.constant dense<0.000000e+00> : vector<1xf32>
      %151 = vector.multi_reduction <add>, %150, %cst_86 [1, 2] : vector<1x1x128xf32> to vector<1xf32>
      %152 = vector.shape_cast %151 : vector<1xf32> to vector<1x1x1xf32>
      %153 = vector.extract %152[0, 0, 0] : f32 from vector<1x1x1xf32>
      %154 = arith.subf %148, %153 : f32
      %cst_87 = arith.constant 3.200000e+01 : f32
      %155 = arith.divf %154, %cst_87 : f32
      %c0_88 = arith.constant 0 : index
      %c0_89 = arith.constant 0 : index
      %156 = vector.load %arg8[%c0_88, %c0_89] : memref<1x128xf32, #tpu.memory_space<vmem>>, vector<1x128xf32>
      %157 = vector.shape_cast %156 : vector<1x128xf32> to vector<1x1x128xf32>
      %cst_90 = arith.constant dense<0.000000e+00> : vector<1xf32>
      %158 = vector.multi_reduction <add>, %157, %cst_90 [1, 2] : vector<1x1x128xf32> to vector<1xf32>
      %159 = vector.shape_cast %158 : vector<1xf32> to vector<1x1x1xf32>
      %160 = vector.extract %159[0, 0, 0] : f32 from vector<1x1x1xf32>
      %cst_91 = arith.constant 2.560000e+02 : f32
      %161 = arith.divf %160, %cst_91 : f32
      %cst_92 = arith.constant 2.500000e+01 : f32
      %162 = arith.mulf %cst_92, %161 : f32
      %163 = arith.addf %71, %125 : f32
      %cst_93 = arith.constant 2.500000e+01 : f32
      %164 = arith.mulf %cst_93, %163 : f32
      %165 = arith.addf %162, %164 : f32
      %166 = arith.addf %101, %155 : f32
      %cst_94 = arith.constant 1.000000e+00 : f32
      %167 = arith.mulf %cst_94, %166 : f32
      %168 = arith.addf %165, %167 : f32
      %c0_95 = arith.constant 0 : index
      %c0_96 = arith.constant 0 : index
      %169 = memref.load %arg3[%c0_95, %c0_96] : memref<1x1xf32, #tpu.memory_space<smem>>
      memref.store %168, %arg3[%c0_95, %c0_96] : memref<1x1xf32, #tpu.memory_space<smem>>
    } else {
    }
    return
  }
  func.func @transform_0(%arg0: i32) -> (i32, i32) {
    %c0_i32 = arith.constant 0 : i32
    %c0_i32_0 = arith.constant 0 : i32
    return %arg0, %c0_i32 : i32, i32
  }
  func.func @transform_1(%arg0: i32) -> (i32, i32) {
    %c0_i32 = arith.constant 0 : i32
    %c0_i32_0 = arith.constant 0 : i32
    return %arg0, %c0_i32 : i32, i32
  }
  func.func @transform_2(%arg0: i32) -> (i32, i32) {
    %c0_i32 = arith.constant 0 : i32
    %c0_i32_0 = arith.constant 0 : i32
    %c0_i32_1 = arith.constant 0 : i32
    return %c0_i32, %c0_i32_0 : i32, i32
  }
}

</mosaic_0001>

<llo_original>
// kernel: tpu_custom_call.1
$region0: #{tpu_custom_call.1}
  #allocation0 [shape = 'u32[]', space=smem, size = 0x4, offset = 0x4, fixed_abs, tag = 'smem constant byte address 0x4 - core index']
  #allocation1 [shape = 'u32[144,128]{1,0:T(1,128)}', space=vmem, size = 0x12000, scoped, tag = 'internal scratch']
  #allocation2 [shape = 'f32[1,128]{1,0:T(1,128)}', space=vmem, size = 0x200, scoped, tag = 'scratch operand']
  #allocation3 [shape = 'f32[1,128]{1,0:T(1,128)}', space=vmem, size = 0x200, scoped, tag = 'scratch operand']
  #allocation4 [shape = 'f32[1,128]{1,0:T(1,128)}', space=vmem, size = 0x200, scoped, tag = 'scratch operand']
  #allocation5 [shape = 'f32[1,128]{1,0:T(1,128)}', space=vmem, size = 0x200, scoped, tag = 'scratch operand']
  #allocation6 [shape = 'f32[1,128]{1,0:T(1,128)}', space=vmem, size = 0x200, scoped, tag = 'scratch operand']
  #allocation7 [shape = 'f32[128,128]{1,0:T(8,128)}', space=vmem, size = 0x10000, scoped, tag = 'scratch operand']
  #allocation8 [shape = 'f32[128,128]{1,0:T(8,128)}', space=vmem, size = 0x10000, scoped, tag = 'scratch operand']
  %s0 = inlined_call_operand.hbm [shape: f32[8,128], index: 0, kind: input, shape index: {}]
  %s1 = inlined_call_operand.hbm [shape: f32[8,128], index: 1, kind: input, shape index: {}]
  %s2 = inlined_call_operand.hbm [shape: f32[1,1], index: 2, kind: output, shape index: {}]
  %s3 = sld [smem:[#allocation0]]
  $region34: #{tpu_custom_call.1} parent=0
    _
  %s5 = ssub.s32 1, %s3
  %s6 = scalar_select 0, %s5, %s3
  $region1: #{tpu_custom_call.1} parent=0
    #allocation9 [shape = 'u8[4096]{0}', space=vmem, size = 0x1000, scoped, tag = 'input window, operand 0, single buffered']
    #allocation10 [shape = 's32[1]{0}', space=sflag, size = 0x4, scoped, tag = 'scoped memory for tpu_custom_call.1']
    #allocation11 [shape = 's32[1]{0}', space=sflag, size = 0x4, scoped, tag = 'scoped memory for tpu_custom_call.1']
    #allocation12 [shape = 'u8[4096]{0}', space=vmem, size = 0x1000, scoped, tag = 'input window, operand 1, single buffered']
    #allocation13 [shape = 's32[1]{0}', space=sflag, size = 0x4, scoped, tag = 'scoped memory for tpu_custom_call.1']
    #allocation14 [shape = 'u8[512]{0}', space=smem, size = 0x200, scoped, tag = 'output window, operand 0, single buffered']
    %7 = vsyncpa [#allocation10], 0
    %8 = vsyncpa [#allocation13], 0
    %9 = vsyncpa [#allocation11], 0
    // Predicated region
    $region2: #{tpu_custom_call.1} parent=1 // pred_check
      _
    $region3: #{tpu_custom_call.1} parent=1 // pred_check_branch
      %11 = sbr.rel (0) target = $region5
    $region4: #{tpu_custom_call.1} parent=1 // pred_region
      %s13 = ssub.s32 128, 128
      %14 = vsyncadd [#allocation10], %s13
      %s16 = sshll.u32 [#allocation9], 4
      %s17 = int_to_ptr.vmem [resolvable:$true] %s16
      %19 = dma.hbm_to_vmem [thread:$0]  %s0, 128, %s17, [#allocation10]
    $region5: #{tpu_custom_call.1} parent=1 // pred_fallthru
      _
    // Predicated region
    $region6: #{tpu_custom_call.1} parent=1 // pred_check
      _
    $region7: #{tpu_custom_call.1} parent=1 // pred_check_branch
      %21 = sbr.rel (0) target = $region9
    $region8: #{tpu_custom_call.1} parent=1 // pred_region
      %s23 = ssub.s32 128, 128
      %24 = vsyncadd [#allocation13], %s23
      %s26 = sshll.u32 [#allocation12], 4
      %s27 = int_to_ptr.vmem [resolvable:$true] %s26
      %29 = dma.hbm_to_vmem [thread:$0]  %s1, 128, %s27, [#allocation13]
    $region9: #{tpu_custom_call.1} parent=1 // pred_fallthru
      _
    // Predicated region
    $region10: #{tpu_custom_call.1} parent=1 // pred_check
      _
    $region11: #{tpu_custom_call.1} parent=1 // pred_check_branch
      %31 = sbr.rel (0) target = $region13
    $region12: #{tpu_custom_call.1} parent=1 // pred_region
      %32 = dma.done [#allocation10], 128
    $region13: #{tpu_custom_call.1} parent=1 // pred_fallthru
      _
    // Predicated region
    $region14: #{tpu_custom_call.1} parent=1 // pred_check
      _
    $region15: #{tpu_custom_call.1} parent=1 // pred_check_branch
      %34 = sbr.rel (0) target = $region17
    $region16: #{tpu_custom_call.1} parent=1 // pred_region
      %35 = dma.done [#allocation13], 128
    $region17: #{tpu_custom_call.1} parent=1 // pred_fallthru
      _
    %p36 = scmp.eq.s32.totalorder 0, 0
    // Predicated region
    $region18: #{tpu_custom_call.1} parent=1 // pred_check
      %p37 = pneg %p36
    $region19: #{tpu_custom_call.1} parent=1 // pred_check_branch
      %39 = sbr.rel (%p37) target = $region21
    $region20: #{tpu_custom_call.1} parent=1 // pred_region
      %40 = vst [vmem:[#allocation2] sm:$0x1] 0.0
      %41 = vst [vmem:[#allocation3] sm:$0x1] 0.0
      %42 = vst [vmem:[#allocation4] sm:$0x1] 0.0
      %43 = vst [vmem:[#allocation5] sm:$0x1] 0.0
      %44 = vst [vmem:[#allocation6] sm:$0x1] 0.0
      %45 = vst [vmem:[#allocation7] sm:$0xff] 0.0
      %46 = vst [vmem:[#allocation7 + $0x8] sm:$0xff] 0.0
      %47 = vst [vmem:[#allocation7 + $0x10] sm:$0xff] 0.0
      %48 = vst [vmem:[#allocation7 + $0x18] sm:$0xff] 0.0
      %49 = vst [vmem:[#allocation7 + $0x20] sm:$0xff] 0.0
      %50 = vst [vmem:[#allocation7 + $0x28] sm:$0xff] 0.0
      %51 = vst [vmem:[#allocation7 + $0x30] sm:$0xff] 0.0
      %52 = vst [vmem:[#allocation7 + $0x38] sm:$0xff] 0.0
      %53 = vst [vmem:[#allocation7 + $0x40] sm:$0xff] 0.0
      %54 = vst [vmem:[#allocation7 + $0x48] sm:$0xff] 0.0
      %55 = vst [vmem:[#allocation7 + $0x50] sm:$0xff] 0.0
      %56 = vst [vmem:[#allocation7 + $0x58] sm:$0xff] 0.0
      %57 = vst [vmem:[#allocation7 + $0x60] sm:$0xff] 0.0
      %58 = vst [vmem:[#allocation7 + $0x68] sm:$0xff] 0.0
      %59 = vst [vmem:[#allocation7 + $0x70] sm:$0xff] 0.0
      %60 = vst [vmem:[#allocation7 + $0x78] sm:$0xff] 0.0
      %61 = vst [vmem:[#allocation8] sm:$0xff] 0.0
      %62 = vst [vmem:[#allocation8 + $0x8] sm:$0xff] 0.0
      %63 = vst [vmem:[#allocation8 + $0x10] sm:$0xff] 0.0
      %64 = vst [vmem:[#allocation8 + $0x18] sm:$0xff] 0.0
      %65 = vst [vmem:[#allocation8 + $0x20] sm:$0xff] 0.0
      %66 = vst [vmem:[#allocation8 + $0x28] sm:$0xff] 0.0
      %67 = vst [vmem:[#allocation8 + $0x30] sm:$0xff] 0.0
      %68 = vst [vmem:[#allocation8 + $0x38] sm:$0xff] 0.0
      %69 = vst [vmem:[#allocation8 + $0x40] sm:$0xff] 0.0
      %70 = vst [vmem:[#allocation8 + $0x48] sm:$0xff] 0.0
      %71 = vst [vmem:[#allocation8 + $0x50] sm:$0xff] 0.0
      %72 = vst [vmem:[#allocation8 + $0x58] sm:$0xff] 0.0
      %73 = vst [vmem:[#allocation8 + $0x60] sm:$0xff] 0.0
      %74 = vst [vmem:[#allocation8 + $0x68] sm:$0xff] 0.0
      %75 = vst [vmem:[#allocation8 + $0x70] sm:$0xff] 0.0
      %76 = vst [vmem:[#allocation8 + $0x78] sm:$0xff] 0.0
    $region21: #{tpu_custom_call.1} parent=1 // pred_fallthru
      _
    %v77 = vld [vmem:[#allocation9] sm:$0xff]
    %v78 = vld [vmem:[#allocation12] sm:$0xff]
    %v79 = vld [vmem:[#allocation2] sm:$0x1]
    %v80 = vrot.slane %v77, 4
    %v81 = vadd.f32 %v77, %v80
    %v82 = vrot.slane %v81, 2
    %v83 = vadd.f32 %v81, %v82
    %v84 = vrot.slane %v83, 1
    %v85 = vadd.f32 %v83, %v84
    %v86 = vadd.f32 %v79, %v85
    %87 = vst [vmem:[#allocation2] sm:$0x1] %v86
    %v88 = vld [vmem:[#allocation3] sm:$0x1]
    %v89 = vrot.slane %v78, 4
    %v90 = vadd.f32 %v78, %v89
    %v91 = vrot.slane %v90, 2
    %v92 = vadd.f32 %v90, %v91
    %v93 = vrot.slane %v92, 1
    %v94 = vadd.f32 %v92, %v93
    %v95 = vadd.f32 %v88, %v94
    %96 = vst [vmem:[#allocation3] sm:$0x1] %v95
    %v97 = vld [vmem:[#allocation4] sm:$0x1]
    %v98 = vmul.f32 %v77, %v77
    %v99 = vrot.slane %v98, 4
    %v100 = vadd.f32 %v98, %v99
    %v101 = vrot.slane %v100, 2
    %v102 = vadd.f32 %v100, %v101
    %v103 = vrot.slane %v102, 1
    %v104 = vadd.f32 %v102, %v103
    %v105 = vadd.f32 %v97, %v104
    %106 = vst [vmem:[#allocation4] sm:$0x1] %v105
    %v107 = vld [vmem:[#allocation5] sm:$0x1]
    %v108 = vmul.f32 %v78, %v78
    %v109 = vrot.slane %v108, 4
    %v110 = vadd.f32 %v108, %v109
    %v111 = vrot.slane %v110, 2
    %v112 = vadd.f32 %v110, %v111
    %v113 = vrot.slane %v112, 1
    %v114 = vadd.f32 %v112, %v113
    %v115 = vadd.f32 %v107, %v114
    %116 = vst [vmem:[#allocation5] sm:$0x1] %v115
    %v117 = vsub.f32 %v77, %v78
    %v118 = vld [vmem:[#allocation6] sm:$0x1]
    %v119 = vmul.f32 %v117, %v117
    %v120 = vrot.slane %v119, 4
    %v121 = vadd.f32 %v119, %v120
    %v122 = vrot.slane %v121, 2
    %v123 = vadd.f32 %v121, %v122
    %v124 = vrot.slane %v123, 1
    %v125 = vadd.f32 %v123, %v124
    %v126 = vadd.f32 %v118, %v125
    %127 = vst [vmem:[#allocation6] sm:$0x1] %v126
    %v128 = vld [vmem:[#allocation7] sm:$0xff]
    %v129 = vld [vmem:[#allocation7 + $0x8] sm:$0xff]
    %v130 = vld [vmem:[#allocation7 + $0x10] sm:$0xff]
    %v131 = vld [vmem:[#allocation7 + $0x18] sm:$0xff]
    %v132 = vld [vmem:[#allocation7 + $0x20] sm:$0xff]
    %v133 = vld [vmem:[#allocation7 + $0x28] sm:$0xff]
    %v134 = vld [vmem:[#allocation7 + $0x30] sm:$0xff]
    %v135 = vld [vmem:[#allocation7 + $0x38] sm:$0xff]
    %v136 = vld [vmem:[#allocation7 + $0x40] sm:$0xff]
    %v137 = vld [vmem:[#allocation7 + $0x48] sm:$0xff]
    %v138 = vld [vmem:[#allocation7 + $0x50] sm:$0xff]
    %v139 = vld [vmem:[#allocation7 + $0x58] sm:$0xff]
    %v140 = vld [vmem:[#allocation7 + $0x60] sm:$0xff]
    %v141 = vld [vmem:[#allocation7 + $0x68] sm:$0xff]
    %v142 = vld [vmem:[#allocation7 + $0x70] sm:$0xff]
    %v143 = vld [vmem:[#allocation7 + $0x78] sm:$0xff]
    %144 = vxpose.xlu0.b32.start [1/16] %v77, 128
    %145 = vxpose.xlu0.b32.cont [2/16] 0.0, 128
    %146 = vxpose.xlu0.b32.cont [3/16] 0.0, 128
    %147 = vxpose.xlu0.b32.cont [4/16] 0.0, 128
    %148 = vxpose.xlu0.b32.cont [5/16] 0.0, 128
    %149 = vxpose.xlu0.b32.cont [6/16] 0.0, 128
    %150 = vxpose.xlu0.b32.cont [7/16] 0.0, 128
    %151 = vxpose.xlu0.b32.cont [8/16] 0.0, 128
    %152 = vxpose.xlu0.b32.cont [9/16] 0.0, 128
    %153 = vxpose.xlu0.b32.cont [10/16] 0.0, 128
    %154 = vxpose.xlu0.b32.cont [11/16] 0.0, 128
    %155 = vxpose.xlu0.b32.cont [12/16] 0.0, 128
    %156 = vxpose.xlu0.b32.cont [13/16] 0.0, 128
    %157 = vxpose.xlu0.b32.cont [14/16] 0.0, 128
    %158 = vxpose.xlu0.b32.cont [15/16] 0.0, 128
    %159 = vxpose.xlu0.b32.end [16/16] 0.0, 128
    %v160 = vpop.trf.xlu0
    %v161 = vpop.trf.xlu0
    %v162 = vpop.trf.xlu0
    %v163 = vpop.trf.xlu0
    %v164 = vpop.trf.xlu0
    %v165 = vpop.trf.xlu0
    %v166 = vpop.trf.xlu0
    %v167 = vpop.trf.xlu0
    %v168 = vpop.trf.xlu0
    %v169 = vpop.trf.xlu0
    %v170 = vpop.trf.xlu0
    %v171 = vpop.trf.xlu0
    %v172 = vpop.trf.xlu0
    %v173 = vpop.trf.xlu0
    %v174 = vpop.trf.xlu0
    %v175 = vpop.trf.xlu0
    %vm176 = vcmask 64512
    %v178 = vsel %vm176, %v160, 0
    %v181 = vsel %vm176, %v161, 0
    %v184 = vsel %vm176, %v162, 0
    %v187 = vsel %vm176, %v163, 0
    %v190 = vsel %vm176, %v164, 0
    %v193 = vsel %vm176, %v165, 0
    %v196 = vsel %vm176, %v166, 0
    %v199 = vsel %vm176, %v167, 0
    %v202 = vsel %vm176, %v168, 0
    %v205 = vsel %vm176, %v169, 0
    %v208 = vsel %vm176, %v170, 0
    %v211 = vsel %vm176, %v171, 0
    %v214 = vsel %vm176, %v172, 0
    %v217 = vsel %vm176, %v173, 0
    %v220 = vsel %vm176, %v174, 0
    %v223 = vsel %vm176, %v175, 0
    %225 = vmatprep.subr.mxu0 0.0
    %226 = vmatpush1.msra.mxu0 0.0
    %227 = vmatprep.subr.mxu0 0.0
    %228 = vmatpush1.msra.mxu0 0.0
    %229 = vmatprep.subr.mxu0 0.0
    %230 = vmatpush1.msra.mxu0 0.0
    %231 = vmatprep.subr.mxu0 0.0
    %232 = vmatpush1.msra.mxu0 0.0
    %233 = vmatprep.subr.mxu0 0.0
    %234 = vmatpush1.msra.mxu0 0.0
    %235 = vmatprep.subr.mxu0 0.0
    %236 = vmatpush1.msra.mxu0 0.0
    %237 = vmatprep.subr.mxu0 0.0
    %238 = vmatpush1.msra.mxu0 0.0
    %239 = vmatprep.subr.mxu0 0.0
    %240 = vmatpush1.msra.mxu0 0.0
    %241 = vmatprep.subr.mxu0 0.0
    %242 = vmatpush1.msra.mxu0 0.0
    %243 = vmatprep.subr.mxu0 0.0
    %244 = vmatpush1.msra.mxu0 0.0
    %245 = vmatprep.subr.mxu0 0.0
    %246 = vmatpush1.msra.mxu0 0.0
    %247 = vmatprep.subr.mxu0 0.0
    %248 = vmatpush1.msra.mxu0 0.0
    %249 = vmatprep.subr.mxu0 0.0
    %250 = vmatpush1.msra.mxu0 0.0
    %251 = vmatprep.subr.mxu0 0.0
    %252 = vmatpush1.msra.mxu0 0.0
    %253 = vmatprep.subr.mxu0 0.0
    %254 = vmatpush1.msra.mxu0 0.0
    %255 = vmatprep.subr.mxu0 0.0
    %256 = vmatpush1.msra.mxu0 %v77
    %257 = vmatprep.subr.mxu0 0.0
    %258 = vmatpush2.msra.mxu0 0.0
    %259 = vmatprep.subr.mxu0 0.0
    %260 = vmatpush2.msra.mxu0 0.0
    %261 = vmatprep.subr.mxu0 0.0
    %262 = vmatpush2.msra.mxu0 0.0
    %263 = vmatprep.subr.mxu0 0.0
    %264 = vmatpush2.msra.mxu0 0.0
    %265 = vmatprep.subr.mxu0 0.0
    %266 = vmatpush2.msra.mxu0 0.0
    %267 = vmatprep.subr.mxu0 0.0
    %268 = vmatpush2.msra.mxu0 0.0
    %269 = vmatprep.subr.mxu0 0.0
    %270 = vmatpush2.msra.mxu0 0.0
    %271 = vmatprep.subr.mxu0 0.0
    %272 = vmatpush2.msra.mxu0 0.0
    %273 = vmatprep.subr.mxu0 0.0
    %274 = vmatpush2.msra.mxu0 0.0
    %275 = vmatprep.subr.mxu0 0.0
    %276 = vmatpush2.msra.mxu0 0.0
    %277 = vmatprep.subr.mxu0 0.0
    %278 = vmatpush2.msra.mxu0 0.0
    %279 = vmatprep.subr.mxu0 0.0
    %280 = vmatpush2.msra.mxu0 0.0
    %281 = vmatprep.subr.mxu0 0.0
    %282 = vmatpush2.msra.mxu0 0.0
    %283 = vmatprep.subr.mxu0 0.0
    %284 = vmatpush2.msra.mxu0 0.0
    %285 = vmatprep.subr.mxu0 0.0
    %286 = vmatpush2.msra.mxu0 0.0
    %287 = vmatprep.subr.mxu0 0.0
    %288 = vmatpush2.msra.mxu0 0.0
    %289 = vmatprep.mubr.f32.mxu0 0.0
    %290 = vmatmul.mubr.f32.gmra.mxu0 %v178
    %v291 = vpop.f32.mrf.mxu0
    %v292 = vadd.f32 0.0, %v291
    %v293 = vpop.f32.mrf.mxu0
    %294 = vmatprep.mubr.f32.mxu0 0.0
    %295 = vmatmul.mubr.f32.gmra.mxu0 %v181
    %v296 = vpop.f32.mrf.mxu0
    %v297 = vadd.f32 0.0, %v296
    %v298 = vpop.f32.mrf.mxu0
    %299 = vmatprep.mubr.f32.mxu0 0.0
    %300 = vmatmul.mubr.f32.gmra.mxu0 %v184
    %v301 = vpop.f32.mrf.mxu0
    %v302 = vadd.f32 0.0, %v301
    %v303 = vpop.f32.mrf.mxu0
    %304 = vmatprep.mubr.f32.mxu0 0.0
    %305 = vmatmul.mubr.f32.gmra.mxu0 %v187
    %v306 = vpop.f32.mrf.mxu0
    %v307 = vadd.f32 0.0, %v306
    %v308 = vpop.f32.mrf.mxu0
    %309 = vmatprep.mubr.f32.mxu0 0.0
    %310 = vmatmul.mubr.f32.gmra.mxu0 %v190
    %v311 = vpop.f32.mrf.mxu0
    %v312 = vadd.f32 0.0, %v311
    %v313 = vpop.f32.mrf.mxu0
    %314 = vmatprep.mubr.f32.mxu0 0.0
    %315 = vmatmul.mubr.f32.gmra.mxu0 %v193
    %v316 = vpop.f32.mrf.mxu0
    %v317 = vadd.f32 0.0, %v316
    %v318 = vpop.f32.mrf.mxu0
    %319 = vmatprep.mubr.f32.mxu0 0.0
    %320 = vmatmul.mubr.f32.gmra.mxu0 %v196
    %v321 = vpop.f32.mrf.mxu0
    %v322 = vadd.f32 0.0, %v321
    %v323 = vpop.f32.mrf.mxu0
    %324 = vmatprep.mubr.f32.mxu0 0.0
    %325 = vmatmul.mubr.f32.gmra.mxu0 %v199
    %v326 = vpop.f32.mrf.mxu0
    %v327 = vadd.f32 0.0, %v326
    %v328 = vpop.f32.mrf.mxu0
    %329 = vmatprep.mubr.f32.mxu0 0.0
    %330 = vmatmul.mubr.f32.gmra.mxu0 %v202
    %v331 = vpop.f32.mrf.mxu0
    %v332 = vadd.f32 0.0, %v331
    %v333 = vpop.f32.mrf.mxu0
    %334 = vmatprep.mubr.f32.mxu0 0.0
    %335 = vmatmul.mubr.f32.gmra.mxu0 %v205
    %v336 = vpop.f32.mrf.mxu0
    %v337 = vadd.f32 0.0, %v336
    %v338 = vpop.f32.mrf.mxu0
    %339 = vmatprep.mubr.f32.mxu0 0.0
    %340 = vmatmul.mubr.f32.gmra.mxu0 %v208
    %v341 = vpop.f32.mrf.mxu0
    %v342 = vadd.f32 0.0, %v341
    %v343 = vpop.f32.mrf.mxu0
    %344 = vmatprep.mubr.f32.mxu0 0.0
    %345 = vmatmul.mubr.f32.gmra.mxu0 %v211
    %v346 = vpop.f32.mrf.mxu0
    %v347 = vadd.f32 0.0, %v346
    %v348 = vpop.f32.mrf.mxu0
    %349 = vmatprep.mubr.f32.mxu0 0.0
    %350 = vmatmul.mubr.f32.gmra.mxu0 %v214
    %v351 = vpop.f32.mrf.mxu0
    %v352 = vadd.f32 0.0, %v351
    %v353 = vpop.f32.mrf.mxu0
    %354 = vmatprep.mubr.f32.mxu0 0.0
    %355 = vmatmul.mubr.f32.gmra.mxu0 %v217
    %v356 = vpop.f32.mrf.mxu0
    %v357 = vadd.f32 0.0, %v356
    %v358 = vpop.f32.mrf.mxu0
    %359 = vmatprep.mubr.f32.mxu0 0.0
    %360 = vmatmul.mubr.f32.gmra.mxu0 %v220
    %v361 = vpop.f32.mrf.mxu0
    %v362 = vadd.f32 0.0, %v361
    %v363 = vpop.f32.mrf.mxu0
    %364 = vmatprep.mubr.f32.mxu0 0.0
    %365 = vmatmul.mubr.f32.gmra.mxu0 %v223
    %v366 = vpop.f32.mrf.mxu0
    %v367 = vadd.f32 0.0, %v366
    %v368 = vpop.f32.mrf.mxu0
    %369 = vdwg.mxu0
    %v370 = vadd.f32 %v128, %v292
    %v371 = vadd.f32 %v129, %v297
    %v372 = vadd.f32 %v130, %v302
    %v373 = vadd.f32 %v131, %v307
    %v374 = vadd.f32 %v132, %v312
    %v375 = vadd.f32 %v133, %v317
    %v376 = vadd.f32 %v134, %v322
    %v377 = vadd.f32 %v135, %v327
    %v378 = vadd.f32 %v136, %v332
    %v379 = vadd.f32 %v137, %v337
    %v380 = vadd.f32 %v138, %v342
    %v381 = vadd.f32 %v139, %v347
    %v382 = vadd.f32 %v140, %v352
    %v383 = vadd.f32 %v141, %v357
    %v384 = vadd.f32 %v142, %v362
    %v385 = vadd.f32 %v143, %v367
    %386 = vst [vmem:[#allocation7] sm:$0xff] %v370
    %387 = vst [vmem:[#allocation7 + $0x8] sm:$0xff] %v371
    %388 = vst [vmem:[#allocation7 + $0x10] sm:$0xff] %v372
    %389 = vst [vmem:[#allocation7 + $0x18] sm:$0xff] %v373
    %390 = vst [vmem:[#allocation7 + $0x20] sm:$0xff] %v374
    %391 = vst [vmem:[#allocation7 + $0x28] sm:$0xff] %v375
    %392 = vst [vmem:[#allocation7 + $0x30] sm:$0xff] %v376
    %393 = vst [vmem:[#allocation7 + $0x38] sm:$0xff] %v377
    %394 = vst [vmem:[#allocation7 + $0x40] sm:$0xff] %v378
    %395 = vst [vmem:[#allocation7 + $0x48] sm:$0xff] %v379
    %396 = vst [vmem:[#allocation7 + $0x50] sm:$0xff] %v380
    %397 = vst [vmem:[#allocation7 + $0x58] sm:$0xff] %v381
    %398 = vst [vmem:[#allocation7 + $0x60] sm:$0xff] %v382
    %399 = vst [vmem:[#allocation7 + $0x68] sm:$0xff] %v383
    %400 = vst [vmem:[#allocation7 + $0x70] sm:$0xff] %v384
    %401 = vst [vmem:[#allocation7 + $0x78] sm:$0xff] %v385
    %v402 = vld [vmem:[#allocation8] sm:$0xff]
    %v403 = vld [vmem:[#allocation8 + $0x8] sm:$0xff]
    %v404 = vld [vmem:[#allocation8 + $0x10] sm:$0xff]
    %v405 = vld [vmem:[#allocation8 + $0x18] sm:$0xff]
    %v406 = vld [vmem:[#allocation8 + $0x20] sm:$0xff]
    %v407 = vld [vmem:[#allocation8 + $0x28] sm:$0xff]
    %v408 = vld [vmem:[#allocation8 + $0x30] sm:$0xff]
    %v409 = vld [vmem:[#allocation8 + $0x38] sm:$0xff]
    %v410 = vld [vmem:[#allocation8 + $0x40] sm:$0xff]
    %v411 = vld [vmem:[#allocation8 + $0x48] sm:$0xff]
    %v412 = vld [vmem:[#allocation8 + $0x50] sm:$0xff]
    %v413 = vld [vmem:[#allocation8 + $0x58] sm:$0xff]
    %v414 = vld [vmem:[#allocation8 + $0x60] sm:$0xff]
    %v415 = vld [vmem:[#allocation8 + $0x68] sm:$0xff]
    %v416 = vld [vmem:[#allocation8 + $0x70] sm:$0xff]
    %v417 = vld [vmem:[#allocation8 + $0x78] sm:$0xff]
    %418 = vxpose.xlu0.b32.start [1/16] %v78, 128
    %419 = vxpose.xlu0.b32.cont [2/16] 0.0, 128
    %420 = vxpose.xlu0.b32.cont [3/16] 0.0, 128
    %421 = vxpose.xlu0.b32.cont [4/16] 0.0, 128
    %422 = vxpose.xlu0.b32.cont [5/16] 0.0, 128
    %423 = vxpose.xlu0.b32.cont [6/16] 0.0, 128
    %424 = vxpose.xlu0.b32.cont [7/16] 0.0, 128
    %425 = vxpose.xlu0.b32.cont [8/16] 0.0, 128
    %426 = vxpose.xlu0.b32.cont [9/16] 0.0, 128
    %427 = vxpose.xlu0.b32.cont [10/16] 0.0, 128
    %428 = vxpose.xlu0.b32.cont [11/16] 0.0, 128
    %429 = vxpose.xlu0.b32.cont [12/16] 0.0, 128
    %430 = vxpose.xlu0.b32.cont [13/16] 0.0, 128
    %431 = vxpose.xlu0.b32.cont [14/16] 0.0, 128
    %432 = vxpose.xlu0.b32.cont [15/16] 0.0, 128
    %433 = vxpose.xlu0.b32.end [16/16] 0.0, 128
    %v434 = vpop.trf.xlu0
    %v435 = vpop.trf.xlu0
    %v436 = vpop.trf.xlu0
    %v437 = vpop.trf.xlu0
    %v438 = vpop.trf.xlu0
    %v439 = vpop.trf.xlu0
    %v440 = vpop.trf.xlu0
    %v441 = vpop.trf.xlu0
    %v442 = vpop.trf.xlu0
    %v443 = vpop.trf.xlu0
    %v444 = vpop.trf.xlu0
    %v445 = vpop.trf.xlu0
    %v446 = vpop.trf.xlu0
    %v447 = vpop.trf.xlu0
    %v448 = vpop.trf.xlu0
    %v449 = vpop.trf.xlu0
    %v451 = vsel %vm176, %v434, 0
    %v454 = vsel %vm176, %v435, 0
    %v457 = vsel %vm176, %v436, 0
    %v460 = vsel %vm176, %v437, 0
    %v463 = vsel %vm176, %v438, 0
    %v466 = vsel %vm176, %v439, 0
    %v469 = vsel %vm176, %v440, 0
    %v472 = vsel %vm176, %v441, 0
    %v475 = vsel %vm176, %v442, 0
    %v478 = vsel %vm176, %v443, 0
    %v481 = vsel %vm176, %v444, 0
    %v484 = vsel %vm176, %v445, 0
    %v487 = vsel %vm176, %v446, 0
    %v490 = vsel %vm176, %v447, 0
    %v493 = vsel %vm176, %v448, 0
    %v496 = vsel %vm176, %v449, 0
    %498 = vmatprep.subr.mxu0 0.0
    %499 = vmatpush1.msra.mxu0 0.0
    %500 = vmatprep.subr.mxu0 0.0
    %501 = vmatpush1.msra.mxu0 0.0
    %502 = vmatprep.subr.mxu0 0.0
    %503 = vmatpush1.msra.mxu0 0.0
    %504 = vmatprep.subr.mxu0 0.0
    %505 = vmatpush1.msra.mxu0 0.0
    %506 = vmatprep.subr.mxu0 0.0
    %507 = vmatpush1.msra.mxu0 0.0
    %508 = vmatprep.subr.mxu0 0.0
    %509 = vmatpush1.msra.mxu0 0.0
    %510 = vmatprep.subr.mxu0 0.0
    %511 = vmatpush1.msra.mxu0 0.0
    %512 = vmatprep.subr.mxu0 0.0
    %513 = vmatpush1.msra.mxu0 0.0
    %514 = vmatprep.subr.mxu0 0.0
    %515 = vmatpush1.msra.mxu0 0.0
    %516 = vmatprep.subr.mxu0 0.0
    %517 = vmatpush1.msra.mxu0 0.0
    %518 = vmatprep.subr.mxu0 0.0
    %519 = vmatpush1.msra.mxu0 0.0
    %520 = vmatprep.subr.mxu0 0.0
    %521 = vmatpush1.msra.mxu0 0.0
    %522 = vmatprep.subr.mxu0 0.0
    %523 = vmatpush1.msra.mxu0 0.0
    %524 = vmatprep.subr.mxu0 0.0
    %525 = vmatpush1.msra.mxu0 0.0
    %526 = vmatprep.subr.mxu0 0.0
    %527 = vmatpush1.msra.mxu0 0.0
    %528 = vmatprep.subr.mxu0 0.0
    %529 = vmatpush1.msra.mxu0 %v78
    %530 = vmatprep.subr.mxu0 0.0
    %531 = vmatpush2.msra.mxu0 0.0
    %532 = vmatprep.subr.mxu0 0.0
    %533 = vmatpush2.msra.mxu0 0.0
    %534 = vmatprep.subr.mxu0 0.0
    %535 = vmatpush2.msra.mxu0 0.0
    %536 = vmatprep.subr.mxu0 0.0
    %537 = vmatpush2.msra.mxu0 0.0
    %538 = vmatprep.subr.mxu0 0.0
    %539 = vmatpush2.msra.mxu0 0.0
    %540 = vmatprep.subr.mxu0 0.0
    %541 = vmatpush2.msra.mxu0 0.0
    %542 = vmatprep.subr.mxu0 0.0
    %543 = vmatpush2.msra.mxu0 0.0
    %544 = vmatprep.subr.mxu0 0.0
    %545 = vmatpush2.msra.mxu0 0.0
    %546 = vmatprep.subr.mxu0 0.0
    %547 = vmatpush2.msra.mxu0 0.0
    %548 = vmatprep.subr.mxu0 0.0
    %549 = vmatpush2.msra.mxu0 0.0
    %550 = vmatprep.subr.mxu0 0.0
    %551 = vmatpush2.msra.mxu0 0.0
    %552 = vmatprep.subr.mxu0 0.0
    %553 = vmatpush2.msra.mxu0 0.0
    %554 = vmatprep.subr.mxu0 0.0
    %555 = vmatpush2.msra.mxu0 0.0
    %556 = vmatprep.subr.mxu0 0.0
    %557 = vmatpush2.msra.mxu0 0.0
    %558 = vmatprep.subr.mxu0 0.0
    %559 = vmatpush2.msra.mxu0 0.0
    %560 = vmatprep.subr.mxu0 0.0
    %561 = vmatpush2.msra.mxu0 0.0
    %562 = vmatprep.mubr.f32.mxu0 0.0
    %563 = vmatmul.mubr.f32.gmra.mxu0 %v451
    %v564 = vpop.f32.mrf.mxu0
    %v565 = vadd.f32 0.0, %v564
    %v566 = vpop.f32.mrf.mxu0
    %567 = vmatprep.mubr.f32.mxu0 0.0
    %568 = vmatmul.mubr.f32.gmra.mxu0 %v454
    %v569 = vpop.f32.mrf.mxu0
    %v570 = vadd.f32 0.0, %v569
    %v571 = vpop.f32.mrf.mxu0
    %572 = vmatprep.mubr.f32.mxu0 0.0
    %573 = vmatmul.mubr.f32.gmra.mxu0 %v457
    %v574 = vpop.f32.mrf.mxu0
    %v575 = vadd.f32 0.0, %v574
    %v576 = vpop.f32.mrf.mxu0
    %577 = vmatprep.mubr.f32.mxu0 0.0
    %578 = vmatmul.mubr.f32.gmra.mxu0 %v460
    %v579 = vpop.f32.mrf.mxu0
    %v580 = vadd.f32 0.0, %v579
    %v581 = vpop.f32.mrf.mxu0
    %582 = vmatprep.mubr.f32.mxu0 0.0
    %583 = vmatmul.mubr.f32.gmra.mxu0 %v463
    %v584 = vpop.f32.mrf.mxu0
    %v585 = vadd.f32 0.0, %v584
    %v586 = vpop.f32.mrf.mxu0
    %587 = vmatprep.mubr.f32.mxu0 0.0
    %588 = vmatmul.mubr.f32.gmra.mxu0 %v466
    %v589 = vpop.f32.mrf.mxu0
    %v590 = vadd.f32 0.0, %v589
    %v591 = vpop.f32.mrf.mxu0
    %592 = vmatprep.mubr.f32.mxu0 0.0
    %593 = vmatmul.mubr.f32.gmra.mxu0 %v469
    %v594 = vpop.f32.mrf.mxu0
    %v595 = vadd.f32 0.0, %v594
    %v596 = vpop.f32.mrf.mxu0
    %597 = vmatprep.mubr.f32.mxu0 0.0
    %598 = vmatmul.mubr.f32.gmra.mxu0 %v472
    %v599 = vpop.f32.mrf.mxu0
    %v600 = vadd.f32 0.0, %v599
    %v601 = vpop.f32.mrf.mxu0
    %602 = vmatprep.mubr.f32.mxu0 0.0
    %603 = vmatmul.mubr.f32.gmra.mxu0 %v475
    %v604 = vpop.f32.mrf.mxu0
    %v605 = vadd.f32 0.0, %v604
    %v606 = vpop.f32.mrf.mxu0
    %607 = vmatprep.mubr.f32.mxu0 0.0
    %608 = vmatmul.mubr.f32.gmra.mxu0 %v478
    %v609 = vpop.f32.mrf.mxu0
    %v610 = vadd.f32 0.0, %v609
    %v611 = vpop.f32.mrf.mxu0
    %612 = vmatprep.mubr.f32.mxu0 0.0
    %613 = vmatmul.mubr.f32.gmra.mxu0 %v481
    %v614 = vpop.f32.mrf.mxu0
    %v615 = vadd.f32 0.0, %v614
    %v616 = vpop.f32.mrf.mxu0
    %617 = vmatprep.mubr.f32.mxu0 0.0
    %618 = vmatmul.mubr.f32.gmra.mxu0 %v484
    %v619 = vpop.f32.mrf.mxu0
    %v620 = vadd.f32 0.0, %v619
    %v621 = vpop.f32.mrf.mxu0
    %622 = vmatprep.mubr.f32.mxu0 0.0
    %623 = vmatmul.mubr.f32.gmra.mxu0 %v487
    %v624 = vpop.f32.mrf.mxu0
    %v625 = vadd.f32 0.0, %v624
    %v626 = vpop.f32.mrf.mxu0
    %627 = vmatprep.mubr.f32.mxu0 0.0
    %628 = vmatmul.mubr.f32.gmra.mxu0 %v490
    %v629 = vpop.f32.mrf.mxu0
    %v630 = vadd.f32 0.0, %v629
    %v631 = vpop.f32.mrf.mxu0
    %632 = vmatprep.mubr.f32.mxu0 0.0
    %633 = vmatmul.mubr.f32.gmra.mxu0 %v493
    %v634 = vpop.f32.mrf.mxu0
    %v635 = vadd.f32 0.0, %v634
    %v636 = vpop.f32.mrf.mxu0
    %637 = vmatprep.mubr.f32.mxu0 0.0
    %638 = vmatmul.mubr.f32.gmra.mxu0 %v496
    %v639 = vpop.f32.mrf.mxu0
    %v640 = vadd.f32 0.0, %v639
    %v641 = vpop.f32.mrf.mxu0
    %642 = vdwg.mxu0
    %v643 = vadd.f32 %v402, %v565
    %v644 = vadd.f32 %v403, %v570
    %v645 = vadd.f32 %v404, %v575
    %v646 = vadd.f32 %v405, %v580
    %v647 = vadd.f32 %v406, %v585
    %v648 = vadd.f32 %v407, %v590
    %v649 = vadd.f32 %v408, %v595
    %v650 = vadd.f32 %v409, %v600
    %v651 = vadd.f32 %v410, %v605
    %v652 = vadd.f32 %v411, %v610
    %v653 = vadd.f32 %v412, %v615
    %v654 = vadd.f32 %v413, %v620
    %v655 = vadd.f32 %v414, %v625
    %v656 = vadd.f32 %v415, %v630
    %v657 = vadd.f32 %v416, %v635
    %v658 = vadd.f32 %v417, %v640
    %659 = vst [vmem:[#allocation8] sm:$0xff] %v643
    %660 = vst [vmem:[#allocation8 + $0x8] sm:$0xff] %v644
    %661 = vst [vmem:[#allocation8 + $0x10] sm:$0xff] %v645
    %662 = vst [vmem:[#allocation8 + $0x18] sm:$0xff] %v646
    %663 = vst [vmem:[#allocation8 + $0x20] sm:$0xff] %v647
    %664 = vst [vmem:[#allocation8 + $0x28] sm:$0xff] %v648
    %665 = vst [vmem:[#allocation8 + $0x30] sm:$0xff] %v649
    %666 = vst [vmem:[#allocation8 + $0x38] sm:$0xff] %v650
    %667 = vst [vmem:[#allocation8 + $0x40] sm:$0xff] %v651
    %668 = vst [vmem:[#allocation8 + $0x48] sm:$0xff] %v652
    %669 = vst [vmem:[#allocation8 + $0x50] sm:$0xff] %v653
    %670 = vst [vmem:[#allocation8 + $0x58] sm:$0xff] %v654
    %671 = vst [vmem:[#allocation8 + $0x60] sm:$0xff] %v655
    %672 = vst [vmem:[#allocation8 + $0x68] sm:$0xff] %v656
    %673 = vst [vmem:[#allocation8 + $0x70] sm:$0xff] %v657
    %674 = vst [vmem:[#allocation8 + $0x78] sm:$0xff] %v658
    // Predicated region
    $region22: #{tpu_custom_call.1} parent=1 // pred_check
      %p675 = pneg %p36
    $region23: #{tpu_custom_call.1} parent=1 // pred_check_branch
      %677 = sbr.rel (%p675) target = $region25
    $region24: #{tpu_custom_call.1} parent=1 // pred_region
      %v678 = vlaneseq
      %v679 = vand.u32 %v678, 127
      %vm680 = vcmp.lt.s32.totalorder %v679, 32
      %v681 = vld [vmem:[#allocation2] sm:$0x1]
      %v682 = vrcp.pop 8.0
      %v683 = vmul.f32 %v681, %v682
      %v684 = vld [vmem:[#allocation4] sm:$0x1]
      %v685 = vmul.f32 %v683, %v681
      %v686 = vsub.f32 %v684, %v685
      %v687 = vrcp.pop 7.0
      %v688 = vmul.f32 %v686, %v687
      %v689 = vmax.f32 %v688, 0.0
      %v690 = vadd.f32 %v689, 0.0001
      %v691 = vrsqrt.pop %v690
      %v692 = vmul.f32 %v690, %v691
      %vm693 = vcmp.eq.f32.partialorder %v690, inf
      %v694 = vsel %vm693, %v690, %v692
      %vm695 = vcmp.eq.f32.partialorder %v690, 0.0
      %v696 = vand.u32 %v690, 2147483648
      %v697 = vsel %vm695, %v696, %v694
      %v698 = vsub.f32 1.0, %v697
      %v699 = vmax.f32 %v698, 0.0
      %v700 = vsel %vm680, %v699, 0.0
      %vm701 = vcmask 1040384
      %v702 = vsel %vm701, %v700, 0.0
      %703 = vadd.xlane.f32.xlu0 %v702
      %v704 = vpop.xlane.xlu0 %703
      %v705 = vrot.slane %v704, 4
      %v706 = vadd.f32 %v704, %v705
      %v707 = vrot.slane %v706, 2
      %v708 = vadd.f32 %v706, %v707
      %v709 = vrot.slane %v708, 1
      %v710 = vadd.f32 %v708, %v709
      %s711 = vtos %v710
      %v712 = vrcp.pop 32.0
      %s713 = vtos %v712
      %s714 = smul.f32 %s711, %s713
      %v715 = vld [vmem:[#allocation7] sm:$0xff]
      %v716 = vld [vmem:[#allocation7 + $0x8] sm:$0xff]
      %v717 = vld [vmem:[#allocation7 + $0x10] sm:$0xff]
      %v718 = vld [vmem:[#allocation7 + $0x18] sm:$0xff]
      %v719 = vld [vmem:[#allocation7 + $0x20] sm:$0xff]
      %v720 = vld [vmem:[#allocation7 + $0x28] sm:$0xff]
      %v721 = vld [vmem:[#allocation7 + $0x30] sm:$0xff]
      %v722 = vld [vmem:[#allocation7 + $0x38] sm:$0xff]
      %v723 = vld [vmem:[#allocation7 + $0x40] sm:$0xff]
      %v724 = vld [vmem:[#allocation7 + $0x48] sm:$0xff]
      %v725 = vld [vmem:[#allocation7 + $0x50] sm:$0xff]
      %v726 = vld [vmem:[#allocation7 + $0x58] sm:$0xff]
      %v727 = vld [vmem:[#allocation7 + $0x60] sm:$0xff]
      %v728 = vld [vmem:[#allocation7 + $0x68] sm:$0xff]
      %v729 = vld [vmem:[#allocation7 + $0x70] sm:$0xff]
      %v730 = vld [vmem:[#allocation7 + $0x78] sm:$0xff]
      %v731 = vmul.f32 %v715, %v715
      %v732 = vmul.f32 %v716, %v716
      %v733 = vmul.f32 %v717, %v717
      %v734 = vmul.f32 %v718, %v718
      %v735 = vmul.f32 %v719, %v719
      %v736 = vmul.f32 %v720, %v720
      %v737 = vmul.f32 %v721, %v721
      %v738 = vmul.f32 %v722, %v722
      %v739 = vmul.f32 %v723, %v723
      %v740 = vmul.f32 %v724, %v724
      %v741 = vmul.f32 %v725, %v725
      %v742 = vmul.f32 %v726, %v726
      %v743 = vmul.f32 %v727, %v727
      %v744 = vmul.f32 %v728, %v728
      %v745 = vmul.f32 %v729, %v729
      %v746 = vmul.f32 %v730, %v730
      %v747 = vadd.f32 %v731, %v732
      %v748 = vadd.f32 %v747, %v733
      %v749 = vadd.f32 %v748, %v734
      %v750 = vadd.f32 %v749, %v735
      %v751 = vadd.f32 %v750, %v736
      %v752 = vadd.f32 %v751, %v737
      %v753 = vadd.f32 %v752, %v738
      %v754 = vadd.f32 %v753, %v739
      %v755 = vadd.f32 %v754, %v740
      %v756 = vadd.f32 %v755, %v741
      %v757 = vadd.f32 %v756, %v742
      %v758 = vadd.f32 %v757, %v743
      %v759 = vadd.f32 %v758, %v744
      %v760 = vadd.f32 %v759, %v745
      %v761 = vadd.f32 %v760, %v746
      %762 = vadd.xlane.f32.xlu0 %v761
      %v763 = vpop.xlane.xlu0 %762
      %v764 = vrot.slane %v763, 4
      %v765 = vadd.f32 %v763, %v764
      %v766 = vrot.slane %v765, 2
      %v767 = vadd.f32 %v765, %v766
      %v768 = vrot.slane %v767, 1
      %v769 = vadd.f32 %v767, %v768
      %s770 = vtos %v769
      %771 = vmatprep.subr.mxu0 0.0
      %772 = vmatpush1.msra.mxu0 %v730
      %773 = vmatprep.subr.mxu0 0.0
      %774 = vmatpush1.msra.mxu0 %v729
      %775 = vmatprep.subr.mxu0 0.0
      %776 = vmatpush1.msra.mxu0 %v728
      %777 = vmatprep.subr.mxu0 0.0
      %778 = vmatpush1.msra.mxu0 %v727
      %779 = vmatprep.subr.mxu0 0.0
      %780 = vmatpush1.msra.mxu0 %v726
      %781 = vmatprep.subr.mxu0 0.0
      %782 = vmatpush1.msra.mxu0 %v725
      %783 = vmatprep.subr.mxu0 0.0
      %784 = vmatpush1.msra.mxu0 %v724
      %785 = vmatprep.subr.mxu0 0.0
      %786 = vmatpush1.msra.mxu0 %v723
      %787 = vmatprep.subr.mxu0 0.0
      %788 = vmatpush1.msra.mxu0 %v722
      %789 = vmatprep.subr.mxu0 0.0
      %790 = vmatpush1.msra.mxu0 %v721
      %791 = vmatprep.subr.mxu0 0.0
      %792 = vmatpush1.msra.mxu0 %v720
      %793 = vmatprep.subr.mxu0 0.0
      %794 = vmatpush1.msra.mxu0 %v719
      %795 = vmatprep.subr.mxu0 0.0
      %796 = vmatpush1.msra.mxu0 %v718
      %797 = vmatprep.subr.mxu0 0.0
      %798 = vmatpush1.msra.mxu0 %v717
      %799 = vmatprep.subr.mxu0 0.0
      %800 = vmatpush1.msra.mxu0 %v716
      %801 = vmatprep.subr.mxu0 0.0
      %802 = vmatpush1.msra.mxu0 %v715
      %803 = vmatprep.subr.mxu0 0.0
      %804 = vmatpush2.msra.mxu0 0.0
      %805 = vmatprep.subr.mxu0 0.0
      %806 = vmatpush2.msra.mxu0 0.0
      %807 = vmatprep.subr.mxu0 0.0
      %808 = vmatpush2.msra.mxu0 0.0
      %809 = vmatprep.subr.mxu0 0.0
      %810 = vmatpush2.msra.mxu0 0.0
      %811 = vmatprep.subr.mxu0 0.0
      %812 = vmatpush2.msra.mxu0 0.0
      %813 = vmatprep.subr.mxu0 0.0
      %814 = vmatpush2.msra.mxu0 0.0
      %815 = vmatprep.subr.mxu0 0.0
      %816 = vmatpush2.msra.mxu0 0.0
      %817 = vmatprep.subr.mxu0 0.0
      %818 = vmatpush2.msra.mxu0 0.0
      %819 = vmatprep.subr.mxu0 0.0
      %820 = vmatpush2.msra.mxu0 0.0
      %821 = vmatprep.subr.mxu0 0.0
      %822 = vmatpush2.msra.mxu0 0.0
      %823 = vmatprep.subr.mxu0 0.0
      %824 = vmatpush2.msra.mxu0 0.0
      %825 = vmatprep.subr.mxu0 0.0
      %826 = vmatpush2.msra.mxu0 0.0
      %827 = vmatprep.subr.mxu0 0.0
      %828 = vmatpush2.msra.mxu0 0.0
      %829 = vmatprep.subr.mxu0 0.0
      %830 = vmatpush2.msra.mxu0 0.0
      %831 = vmatprep.subr.mxu0 0.0
      %832 = vmatpush2.msra.mxu0 0.0
      %833 = vmatprep.subr.mxu0 0.0
      %834 = vmatpush2.msra.mxu0 0.0
      %835 = vmatprep.mubr.f32.mxu0 0.0
      %836 = vmatmul.mubr.f32.gmra.mxu0 %v683
      %v837 = vpop.f32.mrf.mxu0
      %v838 = vadd.f32 0.0, %v837
      %v839 = vpop.f32.mrf.mxu0
      %840 = vdwg.mxu0
      %v841 = vmul.f32 %v838, %v683
      %v842 = vsel %vm701, %v841, 0.0
      %843 = vadd.xlane.f32.xlu0 %v842
      %v844 = vpop.xlane.xlu0 %843
      %v845 = vrot.slane %v844, 4
      %v846 = vadd.f32 %v844, %v845
      %v847 = vrot.slane %v846, 2
      %v848 = vadd.f32 %v846, %v847
      %v849 = vrot.slane %v848, 1
      %v850 = vadd.f32 %v848, %v849
      %s851 = vtos %v850
      %v852 = vmul.f32 %v683, %v683
      %v853 = vsel %vm701, %v852, 0.0
      %854 = vadd.xlane.f32.xlu0 %v853
      %v855 = vpop.xlane.xlu0 %854
      %v856 = vrot.slane %v855, 4
      %v857 = vadd.f32 %v855, %v856
      %v858 = vrot.slane %v857, 2
      %v859 = vadd.f32 %v857, %v858
      %v860 = vrot.slane %v859, 1
      %v861 = vadd.f32 %v859, %v860
      %s862 = vtos %v861
      %s863 = smul.f32 %s851, 16.0
      %s864 = ssub.f32 %s770, %s863
      %s865 = smul.f32 %s862, 8.0
      %s866 = smul.f32 %s865, %s865
      %s867 = sadd.f32 %s864, %s866
      %v868 = vrcp.pop 49.0
      %s869 = vtos %v868
      %s870 = smul.f32 %s867, %s869
      %v871 = vmul.f32 %v688, %v688
      %v872 = vsel %vm701, %v871, 0.0
      %873 = vadd.xlane.f32.xlu0 %v872
      %v874 = vpop.xlane.xlu0 %873
      %v875 = vrot.slane %v874, 4
      %v876 = vadd.f32 %v874, %v875
      %v877 = vrot.slane %v876, 2
      %v878 = vadd.f32 %v876, %v877
      %v879 = vrot.slane %v878, 1
      %v880 = vadd.f32 %v878, %v879
      %s881 = vtos %v880
      %s882 = ssub.f32 %s870, %s881
      %v883 = vrcp.pop 32.0
      %s884 = vtos %v883
      %s885 = smul.f32 %s882, %s884
      %v886 = vld [vmem:[#allocation3] sm:$0x1]
      %v887 = vmul.f32 %v886, %v682
      %v888 = vld [vmem:[#allocation5] sm:$0x1]
      %v889 = vmul.f32 %v887, %v886
      %v890 = vsub.f32 %v888, %v889
      %v891 = vmul.f32 %v890, %v687
      %v892 = vmax.f32 %v891, 0.0
      %v893 = vadd.f32 %v892, 0.0001
      %v894 = vrsqrt.pop %v893
      %v895 = vmul.f32 %v893, %v894
      %vm896 = vcmp.eq.f32.partialorder %v893, inf
      %v897 = vsel %vm896, %v893, %v895
      %vm898 = vcmp.eq.f32.partialorder %v893, 0.0
      %v899 = vand.u32 %v893, 2147483648
      %v900 = vsel %vm898, %v899, %v897
      %v901 = vsub.f32 1.0, %v900
      %v902 = vmax.f32 %v901, 0.0
      %v903 = vsel %vm680, %v902, 0.0
      %v904 = vsel %vm701, %v903, 0.0
      %905 = vadd.xlane.f32.xlu0 %v904
      %v906 = vpop.xlane.xlu0 %905
      %v907 = vrot.slane %v906, 4
      %v908 = vadd.f32 %v906, %v907
      %v909 = vrot.slane %v908, 2
      %v910 = vadd.f32 %v908, %v909
      %v911 = vrot.slane %v910, 1
      %v912 = vadd.f32 %v910, %v911
      %s913 = vtos %v912
      %v914 = vrcp.pop 32.0
      %s915 = vtos %v914
      %s916 = smul.f32 %s913, %s915
      %v917 = vld [vmem:[#allocation8] sm:$0xff]
      %v918 = vld [vmem:[#allocation8 + $0x8] sm:$0xff]
      %v919 = vld [vmem:[#allocation8 + $0x10] sm:$0xff]
      %v920 = vld [vmem:[#allocation8 + $0x18] sm:$0xff]
      %v921 = vld [vmem:[#allocation8 + $0x20] sm:$0xff]
      %v922 = vld [vmem:[#allocation8 + $0x28] sm:$0xff]
      %v923 = vld [vmem:[#allocation8 + $0x30] sm:$0xff]
      %v924 = vld [vmem:[#allocation8 + $0x38] sm:$0xff]
      %v925 = vld [vmem:[#allocation8 + $0x40] sm:$0xff]
      %v926 = vld [vmem:[#allocation8 + $0x48] sm:$0xff]
      %v927 = vld [vmem:[#allocation8 + $0x50] sm:$0xff]
      %v928 = vld [vmem:[#allocation8 + $0x58] sm:$0xff]
      %v929 = vld [vmem:[#allocation8 + $0x60] sm:$0xff]
      %v930 = vld [vmem:[#allocation8 + $0x68] sm:$0xff]
      %v931 = vld [vmem:[#allocation8 + $0x70] sm:$0xff]
      %v932 = vld [vmem:[#allocation8 + $0x78] sm:$0xff]
      %v933 = vmul.f32 %v917, %v917
      %v934 = vmul.f32 %v918, %v918
      %v935 = vmul.f32 %v919, %v919
      %v936 = vmul.f32 %v920, %v920
      %v937 = vmul.f32 %v921, %v921
      %v938 = vmul.f32 %v922, %v922
      %v939 = vmul.f32 %v923, %v923
      %v940 = vmul.f32 %v924, %v924
      %v941 = vmul.f32 %v925, %v925
      %v942 = vmul.f32 %v926, %v926
      %v943 = vmul.f32 %v927, %v927
      %v944 = vmul.f32 %v928, %v928
      %v945 = vmul.f32 %v929, %v929
      %v946 = vmul.f32 %v930, %v930
      %v947 = vmul.f32 %v931, %v931
      %v948 = vmul.f32 %v932, %v932
      %v949 = vadd.f32 %v933, %v934
      %v950 = vadd.f32 %v949, %v935
      %v951 = vadd.f32 %v950, %v936
      %v952 = vadd.f32 %v951, %v937
      %v953 = vadd.f32 %v952, %v938
      %v954 = vadd.f32 %v953, %v939
      %v955 = vadd.f32 %v954, %v940
      %v956 = vadd.f32 %v955, %v941
      %v957 = vadd.f32 %v956, %v942
      %v958 = vadd.f32 %v957, %v943
      %v959 = vadd.f32 %v958, %v944
      %v960 = vadd.f32 %v959, %v945
      %v961 = vadd.f32 %v960, %v946
      %v962 = vadd.f32 %v961, %v947
      %v963 = vadd.f32 %v962, %v948
      %964 = vadd.xlane.f32.xlu0 %v963
      %v965 = vpop.xlane.xlu0 %964
      %v966 = vrot.slane %v965, 4
      %v967 = vadd.f32 %v965, %v966
      %v968 = vrot.slane %v967, 2
      %v969 = vadd.f32 %v967, %v968
      %v970 = vrot.slane %v969, 1
      %v971 = vadd.f32 %v969, %v970
      %s972 = vtos %v971
      %973 = vmatprep.subr.mxu0 0.0
      %974 = vmatpush1.msra.mxu0 %v932
      %975 = vmatprep.subr.mxu0 0.0
      %976 = vmatpush1.msra.mxu0 %v931
      %977 = vmatprep.subr.mxu0 0.0
      %978 = vmatpush1.msra.mxu0 %v930
      %979 = vmatprep.subr.mxu0 0.0
      %980 = vmatpush1.msra.mxu0 %v929
      %981 = vmatprep.subr.mxu0 0.0
      %982 = vmatpush1.msra.mxu0 %v928
      %983 = vmatprep.subr.mxu0 0.0
      %984 = vmatpush1.msra.mxu0 %v927
      %985 = vmatprep.subr.mxu0 0.0
      %986 = vmatpush1.msra.mxu0 %v926
      %987 = vmatprep.subr.mxu0 0.0
      %988 = vmatpush1.msra.mxu0 %v925
      %989 = vmatprep.subr.mxu0 0.0
      %990 = vmatpush1.msra.mxu0 %v924
      %991 = vmatprep.subr.mxu0 0.0
      %992 = vmatpush1.msra.mxu0 %v923
      %993 = vmatprep.subr.mxu0 0.0
      %994 = vmatpush1.msra.mxu0 %v922
      %995 = vmatprep.subr.mxu0 0.0
      %996 = vmatpush1.msra.mxu0 %v921
      %997 = vmatprep.subr.mxu0 0.0
      %998 = vmatpush1.msra.mxu0 %v920
      %999 = vmatprep.subr.mxu0 0.0
      %1000 = vmatpush1.msra.mxu0 %v919
      %1001 = vmatprep.subr.mxu0 0.0
      %1002 = vmatpush1.msra.mxu0 %v918
      %1003 = vmatprep.subr.mxu0 0.0
      %1004 = vmatpush1.msra.mxu0 %v917
      %1005 = vmatprep.subr.mxu0 0.0
      %1006 = vmatpush2.msra.mxu0 0.0
      %1007 = vmatprep.subr.mxu0 0.0
      %1008 = vmatpush2.msra.mxu0 0.0
      %1009 = vmatprep.subr.mxu0 0.0
      %1010 = vmatpush2.msra.mxu0 0.0
      %1011 = vmatprep.subr.mxu0 0.0
      %1012 = vmatpush2.msra.mxu0 0.0
      %1013 = vmatprep.subr.mxu0 0.0
      %1014 = vmatpush2.msra.mxu0 0.0
      %1015 = vmatprep.subr.mxu0 0.0
      %1016 = vmatpush2.msra.mxu0 0.0
      %1017 = vmatprep.subr.mxu0 0.0
      %1018 = vmatpush2.msra.mxu0 0.0
      %1019 = vmatprep.subr.mxu0 0.0
      %1020 = vmatpush2.msra.mxu0 0.0
      %1021 = vmatprep.subr.mxu0 0.0
      %1022 = vmatpush2.msra.mxu0 0.0
      %1023 = vmatprep.subr.mxu0 0.0
      %1024 = vmatpush2.msra.mxu0 0.0
      %1025 = vmatprep.subr.mxu0 0.0
      %1026 = vmatpush2.msra.mxu0 0.0
      %1027 = vmatprep.subr.mxu0 0.0
      %1028 = vmatpush2.msra.mxu0 0.0
      %1029 = vmatprep.subr.mxu0 0.0
      %1030 = vmatpush2.msra.mxu0 0.0
      %1031 = vmatprep.subr.mxu0 0.0
      %1032 = vmatpush2.msra.mxu0 0.0
      %1033 = vmatprep.subr.mxu0 0.0
      %1034 = vmatpush2.msra.mxu0 0.0
      %1035 = vmatprep.subr.mxu0 0.0
      %1036 = vmatpush2.msra.mxu0 0.0
      %1037 = vmatprep.mubr.f32.mxu0 0.0
      %1038 = vmatmul.mubr.f32.gmra.mxu0 %v887
      %v1039 = vpop.f32.mrf.mxu0
      %v1040 = vadd.f32 0.0, %v1039
      %v1041 = vpop.f32.mrf.mxu0
      %1042 = vdwg.mxu0
      %v1043 = vmul.f32 %v1040, %v887
      %v1044 = vsel %vm701, %v1043, 0.0
      %1045 = vadd.xlane.f32.xlu0 %v1044
      %v1046 = vpop.xlane.xlu0 %1045
      %v1047 = vrot.slane %v1046, 4
      %v1048 = vadd.f32 %v1046, %v1047
      %v1049 = vrot.slane %v1048, 2
      %v1050 = vadd.f32 %v1048, %v1049
      %v1051 = vrot.slane %v1050, 1
      %v1052 = vadd.f32 %v1050, %v1051
      %s1053 = vtos %v1052
      %v1054 = vmul.f32 %v887, %v887
      %v1055 = vsel %vm701, %v1054, 0.0
      %1056 = vadd.xlane.f32.xlu0 %v1055
      %v1057 = vpop.xlane.xlu0 %1056
      %v1058 = vrot.slane %v1057, 4
      %v1059 = vadd.f32 %v1057, %v1058
      %v1060 = vrot.slane %v1059, 2
      %v1061 = vadd.f32 %v1059, %v1060
      %v1062 = vrot.slane %v1061, 1
      %v1063 = vadd.f32 %v1061, %v1062
      %s1064 = vtos %v1063
      %s1065 = smul.f32 %s1053, 16.0
      %s1066 = ssub.f32 %s972, %s1065
      %s1067 = smul.f32 %s1064, 8.0
      %s1068 = smul.f32 %s1067, %s1067
      %s1069 = sadd.f32 %s1066, %s1068
      %v1070 = vrcp.pop 49.0
      %s1071 = vtos %v1070
      %s1072 = smul.f32 %s1069, %s1071
      %v1073 = vmul.f32 %v891, %v891
      %v1074 = vsel %vm701, %v1073, 0.0
      %1075 = vadd.xlane.f32.xlu0 %v1074
      %v1076 = vpop.xlane.xlu0 %1075
      %v1077 = vrot.slane %v1076, 4
      %v1078 = vadd.f32 %v1076, %v1077
      %v1079 = vrot.slane %v1078, 2
      %v1080 = vadd.f32 %v1078, %v1079
      %v1081 = vrot.slane %v1080, 1
      %v1082 = vadd.f32 %v1080, %v1081
      %s1083 = vtos %v1082
      %s1084 = ssub.f32 %s1072, %s1083
      %v1085 = vrcp.pop 32.0
      %s1086 = vtos %v1085
      %s1087 = smul.f32 %s1084, %s1086
      %v1088 = vld [vmem:[#allocation6] sm:$0x1]
      %v1089 = vsel %vm701, %v1088, 0.0
      %1090 = vadd.xlane.f32.xlu0 %v1089
      %v1091 = vpop.xlane.xlu0 %1090
      %v1092 = vrot.slane %v1091, 4
      %v1093 = vadd.f32 %v1091, %v1092
      %v1094 = vrot.slane %v1093, 2
      %v1095 = vadd.f32 %v1093, %v1094
      %v1096 = vrot.slane %v1095, 1
      %v1097 = vadd.f32 %v1095, %v1096
      %s1098 = vtos %v1097
      %v1099 = vrcp.pop 256.0
      %s1100 = vtos %v1099
      %s1101 = smul.f32 %s1098, %s1100
      %s1102 = smul.f32 %s1101, 25.0
      %s1103 = sadd.f32 %s714, %s916
      %s1104 = smul.f32 %s1103, 25.0
      %s1105 = sadd.f32 %s1102, %s1104
      %s1106 = sadd.f32 %s885, %s1087
      %s1107 = sadd.f32 %s1105, %s1106
      %s1108 = scalar_lea.smem [#allocation14], 0
      %1109 = sst [smem:[%s1108]] %s1107
    $region25: #{tpu_custom_call.1} parent=1 // pred_fallthru
      _
    // Predicated region
    $region26: #{tpu_custom_call.1} parent=1 // pred_check
      _
    $region27: #{tpu_custom_call.1} parent=1 // pred_check_branch
      %1111 = sbr.rel (0) target = $region29
    $region28: #{tpu_custom_call.1} parent=1 // pred_region
      %s1113 = ssub.s32 16, 16
      %1114 = vsyncadd [#allocation11], %s1113
      %1117 = dma.smem_to_hbm [#allocation14], 16, %s2, [#allocation11]
    $region29: #{tpu_custom_call.1} parent=1 // pred_fallthru
      _
    // Predicated region
    $region30: #{tpu_custom_call.1} parent=1 // pred_check
      _
    $region31: #{tpu_custom_call.1} parent=1 // pred_check_branch
      %1119 = sbr.rel (0) target = $region33
    $region32: #{tpu_custom_call.1} parent=1 // pred_region
      %1120 = dma.done [#allocation11], 16
    $region33: #{tpu_custom_call.1} parent=1 // pred_fallthru
      _
    %1121 = sfence
    %1122 = vsyncpa [#allocation10], 1
    %1123 = vsyncpa [#allocation13], 1
    %1124 = vsyncpa [#allocation11], 1

</llo_original>
